<compile_context>
chip_gen: v7x
topology: tpu7x:2x2x1
jax: 0.10.0
libtpu: 0.0.40
codegen_flags: <defaults>
</compile_context>

<pallas_src>
import functools

import jax
import jax.numpy as jnp
from jax.experimental import pallas as pl
from jax.experimental.pallas import tpu as pltpu


def _map_attention_kernel(seed_ref, x_ref, wq_ref, wk_ref, wv_ref, wp_ref,
                          bp_ref, o_ref, vals_ref, *, scale, n_heads,
                          head_dim):
    tb, K, C = seed_ref.shape
    _, N, _ = x_ref.shape
    dh = head_dim

    # Flatten the batch tile into the matmul M dimension (lane dim C is kept),
    # and cast activations to bf16 for the MXU.
    seed_flat = seed_ref[...].reshape(tb * K, C).astype(jnp.bfloat16)
    x_flat = x_ref[...].reshape(tb * N, C).astype(jnp.bfloat16)

    # Statically-unrolled head loop; per-head weights are leading-axis loads
    # from VMEM-resident (H, C, Dh) tensors, so no in-kernel lane slicing of
    # activations is needed for the projections.
    for h in range(n_heads):
        q = jnp.dot(seed_flat, wq_ref[h],
                    preferred_element_type=jnp.float32)              # (tb*K, dh)
        k = jnp.dot(x_flat, wk_ref[h],
                    preferred_element_type=jnp.float32)              # (tb*N, dh)
        v = jnp.dot(x_flat, wv_ref[h],
                    preferred_element_type=jnp.float32)              # (tb*N, dh)

        qb = q.reshape(tb, K, dh).astype(jnp.bfloat16)
        kb = k.reshape(tb, N, dh).astype(jnp.bfloat16)
        vb = v.reshape(tb, N, dh).astype(jnp.bfloat16)

        # scores = (q @ k^T) * scale, batched over the tile's batch dim.
        s = jnp.einsum("bkd,bnd->bkn", qb, kb,
                       preferred_element_type=jnp.float32) * scale   # (tb, K, N)

        # Numerically-stable softmax along N, kept in f32.
        s = s - jnp.max(s, axis=-1, keepdims=True)
        p = jnp.exp(s)
        attn = p * pl.reciprocal(jnp.sum(p, axis=-1, keepdims=True),
                                 approx=True)

        vals_h = jnp.einsum("bkn,bnd->bkd", attn.astype(jnp.bfloat16), vb,
                            preferred_element_type=jnp.float32)      # (tb, K, dh)
        # Stage this head's values so the output projection can contract over
        # the full C dimension in a single MXU call.
        vals_ref[:, h * dh:(h + 1) * dh] = vals_h.reshape(tb * K, dh)

    out = jnp.dot(vals_ref[...].astype(jnp.bfloat16), wp_ref[...],
                  preferred_element_type=jnp.float32) + bp_ref[...]  # (tb*K, C)
    o_ref[...] = out.reshape(tb, K, C).astype(o_ref.dtype)


def _pick_batch_tile(B, K):
    """Fold enough batch items into a tile to fill MXU rows, while keeping
    >= 2 grid steps when possible (v7x shards the parallel axis over 2 TCs)."""
    target_rows = 256
    tb = max(1, min(B, target_rows // max(K, 1)))
    if tb >= B and B > 1:
        tb = max(1, B // 2)
    while B % tb:
        tb -= 1
    return tb


def map_attention(seed, x, wq, wkv, wp, bp, *, n_heads, batch_tile=None):
    """MAPAttention forward (mask=None path).

    Args:
      seed: (B, K, C)  query seed tokens.
      x:    (B, N, C)  pooled inputs.
      wq:   (C, C)     PyTorch nn.Linear weight for q (no bias).
      wkv:  (2C, C)    PyTorch nn.Linear weight for kv (no bias).
      wp:   (C, C)     output-projection weight.
      bp:   (C,)       output-projection bias.
    Returns:
      (B, K, C)
    """
    B, K, C = seed.shape
    Bx, N, Cx = x.shape
    assert B == Bx and C == Cx, "seed / x batch & embed dims must match"
    assert C % n_heads == 0
    dh = C // n_heads
    scale = dh ** -0.5

    tb = batch_tile if batch_tile is not None else _pick_batch_tile(B, K)
    assert B % tb == 0
    grid_b = B // tb

    # Per-head weight rearrangement + bf16 cast.  NOTE: for inference / step
    # loops this should be precomputed once and cached outside the hot path.
    wq_h = wq.T.reshape(C, n_heads, dh).transpose(1, 0, 2).astype(jnp.bfloat16)
    wkv_t = wkv.T                                                     # (C, 2C)
    wk_h = (wkv_t[:, :C].reshape(C, n_heads, dh)
            .transpose(1, 0, 2).astype(jnp.bfloat16))                 # (H, C, Dh)
    wv_h = (wkv_t[:, C:].reshape(C, n_heads, dh)
            .transpose(1, 0, 2).astype(jnp.bfloat16))                 # (H, C, Dh)
    wp_t = wp.T.astype(jnp.bfloat16)                                  # (C, C)
    bp2 = bp.reshape(1, C).astype(jnp.float32)

    kernel = functools.partial(_map_attention_kernel, scale=scale,
                               n_heads=n_heads, head_dim=dh)

    # Rough VMEM budget: resident bf16 weights + double-buffered activation
    # tiles + the f32 staging scratch; clamp so it stays valid on v7x (64 MiB).
    itemsize = jnp.dtype(seed.dtype).itemsize
    weight_bytes = 2 * (4 * C * C) + 4 * C
    act_bytes = 2 * itemsize * (tb * K * C + tb * N * C + tb * K * C)
    scratch_bytes = 4 * tb * K * C
    est = weight_bytes + act_bytes + scratch_bytes
    vmem_limit = int(min(96 * 1024 * 1024, max(32 * 1024 * 1024, 2 * est)))

    out = pl.pallas_call(
        kernel,
        out_shape=jax.ShapeDtypeStruct((B, K, C), seed.dtype),
        grid_spec=pltpu.PrefetchScalarGridSpec(
            num_scalar_prefetch=0,
            grid=(grid_b,),
            in_specs=[
                pl.BlockSpec((tb, K, C), lambda b: (b, 0, 0)),         # seed tile
                pl.BlockSpec((tb, N, C), lambda b: (b, 0, 0)),         # x tile
                pl.BlockSpec((n_heads, C, dh), lambda b: (0, 0, 0)),   # Wq (resident)
                pl.BlockSpec((n_heads, C, dh), lambda b: (0, 0, 0)),   # Wk (resident)
                pl.BlockSpec((n_heads, C, dh), lambda b: (0, 0, 0)),   # Wv (resident)
                pl.BlockSpec((C, C), lambda b: (0, 0)),                # Wproj^T (resident)
                pl.BlockSpec((1, C), lambda b: (0, 0)),                # bias (resident)
            ],
            out_specs=pl.BlockSpec((tb, K, C), lambda b: (b, 0, 0)),
            scratch_shapes=[pltpu.VMEM((tb * K, C), jnp.float32)],
        ),
        compiler_params=pltpu.CompilerParams(
            dimension_semantics=("parallel",),
            vmem_limit_bytes=vmem_limit),
    )(seed, x, wq_h, wk_h, wv_h, wp_t, bp2)

    return out


if __name__ == "__main__":
    # Small correctness-sized shapes: batch=2, seed tokens K=8, pool tokens
    # N=16, embed_dim=32, n_heads=4 (head_dim=8).
    B, K, N, C, H = 2, 8, 16, 32, 4
    dh = C // H

    key = jax.random.PRNGKey(0)
    ks, kx, kq, kkv, kp, kb = jax.random.split(key, 6)

    seed = jax.random.normal(ks, (B, K, C), dtype=jnp.float32)
    x = jax.random.normal(kx, (B, N, C), dtype=jnp.float32)
    bound = 1.0 / (C ** 0.5)
    wq = jax.random.uniform(kq, (C, C), jnp.float32, -bound, bound)
    wkv = jax.random.uniform(kkv, (2 * C, C), jnp.float32, -bound, bound)
    wp = jax.random.uniform(kp, (C, C), jnp.float32, -bound, bound)
    bp = jax.random.uniform(kb, (C,), jnp.float32, -bound, bound)

    y = map_attention(seed, x, wq, wkv, wp, bp, n_heads=H)
    y = jax.block_until_ready(y)

    # Pure-JAX f32 reference mirroring the PyTorch forward.
    q_r = (seed @ wq.T).reshape(B, K, H, dh).transpose(0, 2, 1, 3)
    kv_r = (x @ wkv.T).reshape(B, N, 2, H, dh).transpose(2, 0, 3, 1, 4)
    k_r, v_r = kv_r[0], kv_r[1]
    scores = jnp.einsum("bhkd,bhnd->bhkn", q_r, k_r) * (dh ** -0.5)
    attn = jax.nn.softmax(scores, axis=-1)
    vals = jnp.einsum("bhkn,bhnd->bhkd", attn, v_r).transpose(0, 2, 1, 3)
    y_ref = vals.reshape(B, K, C) @ wp.T + bp

    # Tolerance accounts for bf16 MXU operands + approx reciprocal in-kernel
    # vs. the full-f32 reference.
    assert jnp.allclose(y, y_ref, atol=3e-2, rtol=3e-2), "mismatch vs reference"

    print("KERNEL_OK")
</pallas_src>

<mosaic_0001>
module attributes {stable_mosaic.version = 11 : i64} {
  func.func @_map_attention_kernel(%arg0: i32, %arg1: memref<1x8x32xf32, #tpu.memory_space<vmem>>, %arg2: memref<1x16x32xf32, #tpu.memory_space<vmem>>, %arg3: memref<4x32x8xbf16, #tpu.memory_space<vmem>>, %arg4: memref<4x32x8xbf16, #tpu.memory_space<vmem>>, %arg5: memref<4x32x8xbf16, #tpu.memory_space<vmem>>, %arg6: memref<32x32xbf16, #tpu.memory_space<vmem>>, %arg7: memref<1x32xf32, #tpu.memory_space<vmem>>, %arg8: memref<1x8x32xf32, #tpu.memory_space<vmem>>, %arg9: memref<8x32xf32, #tpu.memory_space<vmem>>) attributes {dimension_semantics = [#tpu.dimension_semantics<parallel>], iteration_bounds = array<i64: 2>, scalar_prefetch = 0 : i64, scratch_operands = 1 : i64, tpu.core_type = #tpu.core_type<tc>, window_params = [{transform_indices = @transform_0, window_bounds = array<i64: 1, 8, 32>}, {transform_indices = @transform_1, window_bounds = array<i64: 1, 16, 32>}, {pipeline_mode = #tpu.pipeline_mode<synchronous>, transform_indices = @transform_2, window_bounds = array<i64: 4, 32, 8>}, {pipeline_mode = #tpu.pipeline_mode<synchronous>, transform_indices = @transform_3, window_bounds = array<i64: 4, 32, 8>}, {pipeline_mode = #tpu.pipeline_mode<synchronous>, transform_indices = @transform_4, window_bounds = array<i64: 4, 32, 8>}, {pipeline_mode = #tpu.pipeline_mode<synchronous>, transform_indices = @transform_5, window_bounds = array<i64: 32, 32>}, {pipeline_mode = #tpu.pipeline_mode<synchronous>, transform_indices = @transform_6, window_bounds = array<i64: 1, 32>}, {transform_indices = @transform_7, window_bounds = array<i64: 1, 8, 32>}]} {
    %c0 = arith.constant 0 : index
    %c0_0 = arith.constant 0 : index
    %c0_1 = arith.constant 0 : index
    %0 = vector.load %arg1[%c0, %c0_0, %c0_1] : memref<1x8x32xf32, #tpu.memory_space<vmem>>, vector<1x8x32xf32>
    %1 = vector.shape_cast %0 : vector<1x8x32xf32> to vector<8x32xf32>
    %2 = arith.truncf %1 : vector<8x32xf32> to vector<8x32xbf16>
    %c0_2 = arith.constant 0 : index
    %c0_3 = arith.constant 0 : index
    %c0_4 = arith.constant 0 : index
    %3 = vector.load %arg2[%c0_2, %c0_3, %c0_4] : memref<1x16x32xf32, #tpu.memory_space<vmem>>, vector<1x16x32xf32>
    %4 = vector.shape_cast %3 : vector<1x16x32xf32> to vector<16x32xf32>
    %5 = arith.truncf %4 : vector<16x32xf32> to vector<16x32xbf16>
    %c0_5 = arith.constant 0 : index
    %c0_6 = arith.constant 0 : index
    %c0_7 = arith.constant 0 : index
    %6 = vector.load %arg3[%c0_5, %c0_6, %c0_7] : memref<4x32x8xbf16, #tpu.memory_space<vmem>>, vector<1x32x8xbf16>
    %7 = vector.shape_cast %6 : vector<1x32x8xbf16> to vector<32x8xbf16>
    %cst = arith.constant dense<0.000000e+00> : vector<8x8xf32>
    %8 = tpu.matmul %2, %7, %cst {dimension_numbers = #tpu.dot_dimension_numbers<[1], [0], [0], [1], [0, 0, 1, 1], [], []>} : vector<8x32xbf16>, vector<32x8xbf16>, vector<8x8xf32> -> vector<8x8xf32>
    %c0_8 = arith.constant 0 : index
    %c0_9 = arith.constant 0 : index
    %c0_10 = arith.constant 0 : index
    %9 = vector.load %arg4[%c0_8, %c0_9, %c0_10] : memref<4x32x8xbf16, #tpu.memory_space<vmem>>, vector<1x32x8xbf16>
    %10 = vector.shape_cast %9 : vector<1x32x8xbf16> to vector<32x8xbf16>
    %cst_11 = arith.constant dense<0.000000e+00> : vector<16x8xf32>
    %11 = tpu.matmul %5, %10, %cst_11 {dimension_numbers = #tpu.dot_dimension_numbers<[1], [0], [0], [1], [0, 0, 1, 1], [], []>} : vector<16x32xbf16>, vector<32x8xbf16>, vector<16x8xf32> -> vector<16x8xf32>
    %c0_12 = arith.constant 0 : index
    %c0_13 = arith.constant 0 : index
    %c0_14 = arith.constant 0 : index
    %12 = vector.load %arg5[%c0_12, %c0_13, %c0_14] : memref<4x32x8xbf16, #tpu.memory_space<vmem>>, vector<1x32x8xbf16>
    %13 = vector.shape_cast %12 : vector<1x32x8xbf16> to vector<32x8xbf16>
    %cst_15 = arith.constant dense<0.000000e+00> : vector<16x8xf32>
    %14 = tpu.matmul %5, %13, %cst_15 {dimension_numbers = #tpu.dot_dimension_numbers<[1], [0], [0], [1], [0, 0, 1, 1], [], []>} : vector<16x32xbf16>, vector<32x8xbf16>, vector<16x8xf32> -> vector<16x8xf32>
    %15 = vector.shape_cast %8 : vector<8x8xf32> to vector<1x8x8xf32>
    %16 = arith.truncf %15 : vector<1x8x8xf32> to vector<1x8x8xbf16>
    %17 = vector.shape_cast %11 : vector<16x8xf32> to vector<1x16x8xf32>
    %18 = arith.truncf %17 : vector<1x16x8xf32> to vector<1x16x8xbf16>
    %19 = vector.shape_cast %14 : vector<16x8xf32> to vector<1x16x8xf32>
    %20 = arith.truncf %19 : vector<1x16x8xf32> to vector<1x16x8xbf16>
    "tpu.trace_start"() <{level = 10 : i32, message = "bkd,bnd->bkn"}> : () -> ()
    %cst_16 = arith.constant dense<0.000000e+00> : vector<1x8x16xf32>
    %21 = tpu.matmul %16, %18, %cst_16 {dimension_numbers = #tpu.dot_dimension_numbers<[2], [2], [1], [1], [0, 0, 0, 1, 1, 1], [0], [0]>} : vector<1x8x8xbf16>, vector<1x16x8xbf16>, vector<1x8x16xf32> -> vector<1x8x16xf32>
    "tpu.trace_stop"() : () -> ()
    %cst_17 = arith.constant 0.353553385 : f32
    %22 = vector.broadcast %cst_17 : f32 to vector<1x8x16xf32>
    %23 = arith.mulf %21, %22 : vector<1x8x16xf32>
    %cst_18 = arith.constant dense<0xFF800000> : vector<1x8xf32>
    %24 = vector.multi_reduction <maximumf>, %23, %cst_18 [2] : vector<1x8x16xf32> to vector<1x8xf32>
    %25 = vector.shape_cast %24 : vector<1x8xf32> to vector<1x8x1xf32>
    %26 = vector.broadcast %25 : vector<1x8x1xf32> to vector<1x8x16xf32>
    %27 = arith.subf %23, %26 : vector<1x8x16xf32>
    %28 = math.exp %27 : vector<1x8x16xf32>
    %cst_19 = arith.constant dense<0.000000e+00> : vector<1x8xf32>
    %29 = vector.multi_reduction <add>, %28, %cst_19 [2] : vector<1x8x16xf32> to vector<1x8xf32>
    %30 = vector.shape_cast %29 : vector<1x8xf32> to vector<1x8x1xf32>
    %31 = tpu.reciprocal %30 {approx = true} : vector<1x8x1xf32> -> vector<1x8x1xf32>
    %32 = vector.broadcast %31 : vector<1x8x1xf32> to vector<1x8x16xf32>
    %33 = arith.mulf %28, %32 : vector<1x8x16xf32>
    %34 = arith.truncf %33 : vector<1x8x16xf32> to vector<1x8x16xbf16>
    "tpu.trace_start"() <{level = 10 : i32, message = "bkn,bnd->bkd"}> : () -> ()
    %cst_20 = arith.constant dense<0.000000e+00> : vector<1x8x8xf32>
    %35 = tpu.matmul %34, %20, %cst_20 {dimension_numbers = #tpu.dot_dimension_numbers<[2], [1], [1], [2], [0, 0, 0, 1, 1, 2], [0], [0]>} : vector<1x8x16xbf16>, vector<1x16x8xbf16>, vector<1x8x8xf32> -> vector<1x8x8xf32>
    "tpu.trace_stop"() : () -> ()
    %36 = vector.shape_cast %35 : vector<1x8x8xf32> to vector<8x8xf32>
    %c0_21 = arith.constant 0 : index
    %c0_22 = arith.constant 0 : index
    %37 = vector.load %arg9[%c0_21, %c0_22] : memref<8x32xf32, #tpu.memory_space<vmem>>, vector<8x8xf32>
    tpu.vector_store %arg9[%c0_21, %c0_22], %36 {strides = array<i32>} : memref<8x32xf32, #tpu.memory_space<vmem>>, vector<8x8xf32>,
    %c1 = arith.constant 1 : index
    %c0_23 = arith.constant 0 : index
    %c0_24 = arith.constant 0 : index
    %38 = vector.load %arg3[%c1, %c0_23, %c0_24] : memref<4x32x8xbf16, #tpu.memory_space<vmem>>, vector<1x32x8xbf16>
    %39 = vector.shape_cast %38 : vector<1x32x8xbf16> to vector<32x8xbf16>
    %cst_25 = arith.constant dense<0.000000e+00> : vector<8x8xf32>
    %40 = tpu.matmul %2, %39, %cst_25 {dimension_numbers = #tpu.dot_dimension_numbers<[1], [0], [0], [1], [0, 0, 1, 1], [], []>} : vector<8x32xbf16>, vector<32x8xbf16>, vector<8x8xf32> -> vector<8x8xf32>
    %c1_26 = arith.constant 1 : index
    %c0_27 = arith.constant 0 : index
    %c0_28 = arith.constant 0 : index
    %41 = vector.load %arg4[%c1_26, %c0_27, %c0_28] : memref<4x32x8xbf16, #tpu.memory_space<vmem>>, vector<1x32x8xbf16>
    %42 = vector.shape_cast %41 : vector<1x32x8xbf16> to vector<32x8xbf16>
    %cst_29 = arith.constant dense<0.000000e+00> : vector<16x8xf32>
    %43 = tpu.matmul %5, %42, %cst_29 {dimension_numbers = #tpu.dot_dimension_numbers<[1], [0], [0], [1], [0, 0, 1, 1], [], []>} : vector<16x32xbf16>, vector<32x8xbf16>, vector<16x8xf32> -> vector<16x8xf32>
    %c1_30 = arith.constant 1 : index
    %c0_31 = arith.constant 0 : index
    %c0_32 = arith.constant 0 : index
    %44 = vector.load %arg5[%c1_30, %c0_31, %c0_32] : memref<4x32x8xbf16, #tpu.memory_space<vmem>>, vector<1x32x8xbf16>
    %45 = vector.shape_cast %44 : vector<1x32x8xbf16> to vector<32x8xbf16>
    %cst_33 = arith.constant dense<0.000000e+00> : vector<16x8xf32>
    %46 = tpu.matmul %5, %45, %cst_33 {dimension_numbers = #tpu.dot_dimension_numbers<[1], [0], [0], [1], [0, 0, 1, 1], [], []>} : vector<16x32xbf16>, vector<32x8xbf16>, vector<16x8xf32> -> vector<16x8xf32>
    %47 = vector.shape_cast %40 : vector<8x8xf32> to vector<1x8x8xf32>
    %48 = arith.truncf %47 : vector<1x8x8xf32> to vector<1x8x8xbf16>
    %49 = vector.shape_cast %43 : vector<16x8xf32> to vector<1x16x8xf32>
    %50 = arith.truncf %49 : vector<1x16x8xf32> to vector<1x16x8xbf16>
    %51 = vector.shape_cast %46 : vector<16x8xf32> to vector<1x16x8xf32>
    %52 = arith.truncf %51 : vector<1x16x8xf32> to vector<1x16x8xbf16>
    "tpu.trace_start"() <{level = 10 : i32, message = "bkd,bnd->bkn"}> : () -> ()
    %cst_34 = arith.constant dense<0.000000e+00> : vector<1x8x16xf32>
    %53 = tpu.matmul %48, %50, %cst_34 {dimension_numbers = #tpu.dot_dimension_numbers<[2], [2], [1], [1], [0, 0, 0, 1, 1, 1], [0], [0]>} : vector<1x8x8xbf16>, vector<1x16x8xbf16>, vector<1x8x16xf32> -> vector<1x8x16xf32>
    "tpu.trace_stop"() : () -> ()
    %cst_35 = arith.constant 0.353553385 : f32
    %54 = vector.broadcast %cst_35 : f32 to vector<1x8x16xf32>
    %55 = arith.mulf %53, %54 : vector<1x8x16xf32>
    %cst_36 = arith.constant dense<0xFF800000> : vector<1x8xf32>
    %56 = vector.multi_reduction <maximumf>, %55, %cst_36 [2] : vector<1x8x16xf32> to vector<1x8xf32>
    %57 = vector.shape_cast %56 : vector<1x8xf32> to vector<1x8x1xf32>
    %58 = vector.broadcast %57 : vector<1x8x1xf32> to vector<1x8x16xf32>
    %59 = arith.subf %55, %58 : vector<1x8x16xf32>
    %60 = math.exp %59 : vector<1x8x16xf32>
    %cst_37 = arith.constant dense<0.000000e+00> : vector<1x8xf32>
    %61 = vector.multi_reduction <add>, %60, %cst_37 [2] : vector<1x8x16xf32> to vector<1x8xf32>
    %62 = vector.shape_cast %61 : vector<1x8xf32> to vector<1x8x1xf32>
    %63 = tpu.reciprocal %62 {approx = true} : vector<1x8x1xf32> -> vector<1x8x1xf32>
    %64 = vector.broadcast %63 : vector<1x8x1xf32> to vector<1x8x16xf32>
    %65 = arith.mulf %60, %64 : vector<1x8x16xf32>
    %66 = arith.truncf %65 : vector<1x8x16xf32> to vector<1x8x16xbf16>
    "tpu.trace_start"() <{level = 10 : i32, message = "bkn,bnd->bkd"}> : () -> ()
    %cst_38 = arith.constant dense<0.000000e+00> : vector<1x8x8xf32>
    %67 = tpu.matmul %66, %52, %cst_38 {dimension_numbers = #tpu.dot_dimension_numbers<[2], [1], [1], [2], [0, 0, 0, 1, 1, 2], [0], [0]>} : vector<1x8x16xbf16>, vector<1x16x8xbf16>, vector<1x8x8xf32> -> vector<1x8x8xf32>
    "tpu.trace_stop"() : () -> ()
    %68 = vector.shape_cast %67 : vector<1x8x8xf32> to vector<8x8xf32>
    %c0_39 = arith.constant 0 : index
    %c8 = arith.constant 8 : index
    %69 = vector.load %arg9[%c0_39, %c8] : memref<8x32xf32, #tpu.memory_space<vmem>>, vector<8x8xf32>
    tpu.vector_store %arg9[%c0_39, %c8], %68 {strides = array<i32>} : memref<8x32xf32, #tpu.memory_space<vmem>>, vector<8x8xf32>,
    %c2 = arith.constant 2 : index
    %c0_40 = arith.constant 0 : index
    %c0_41 = arith.constant 0 : index
    %70 = vector.load %arg3[%c2, %c0_40, %c0_41] : memref<4x32x8xbf16, #tpu.memory_space<vmem>>, vector<1x32x8xbf16>
    %71 = vector.shape_cast %70 : vector<1x32x8xbf16> to vector<32x8xbf16>
    %cst_42 = arith.constant dense<0.000000e+00> : vector<8x8xf32>
    %72 = tpu.matmul %2, %71, %cst_42 {dimension_numbers = #tpu.dot_dimension_numbers<[1], [0], [0], [1], [0, 0, 1, 1], [], []>} : vector<8x32xbf16>, vector<32x8xbf16>, vector<8x8xf32> -> vector<8x8xf32>
    %c2_43 = arith.constant 2 : index
    %c0_44 = arith.constant 0 : index
    %c0_45 = arith.constant 0 : index
    %73 = vector.load %arg4[%c2_43, %c0_44, %c0_45] : memref<4x32x8xbf16, #tpu.memory_space<vmem>>, vector<1x32x8xbf16>
    %74 = vector.shape_cast %73 : vector<1x32x8xbf16> to vector<32x8xbf16>
    %cst_46 = arith.constant dense<0.000000e+00> : vector<16x8xf32>
    %75 = tpu.matmul %5, %74, %cst_46 {dimension_numbers = #tpu.dot_dimension_numbers<[1], [0], [0], [1], [0, 0, 1, 1], [], []>} : vector<16x32xbf16>, vector<32x8xbf16>, vector<16x8xf32> -> vector<16x8xf32>
    %c2_47 = arith.constant 2 : index
    %c0_48 = arith.constant 0 : index
    %c0_49 = arith.constant 0 : index
    %76 = vector.load %arg5[%c2_47, %c0_48, %c0_49] : memref<4x32x8xbf16, #tpu.memory_space<vmem>>, vector<1x32x8xbf16>
    %77 = vector.shape_cast %76 : vector<1x32x8xbf16> to vector<32x8xbf16>
    %cst_50 = arith.constant dense<0.000000e+00> : vector<16x8xf32>
    %78 = tpu.matmul %5, %77, %cst_50 {dimension_numbers = #tpu.dot_dimension_numbers<[1], [0], [0], [1], [0, 0, 1, 1], [], []>} : vector<16x32xbf16>, vector<32x8xbf16>, vector<16x8xf32> -> vector<16x8xf32>
    %79 = vector.shape_cast %72 : vector<8x8xf32> to vector<1x8x8xf32>
    %80 = arith.truncf %79 : vector<1x8x8xf32> to vector<1x8x8xbf16>
    %81 = vector.shape_cast %75 : vector<16x8xf32> to vector<1x16x8xf32>
    %82 = arith.truncf %81 : vector<1x16x8xf32> to vector<1x16x8xbf16>
    %83 = vector.shape_cast %78 : vector<16x8xf32> to vector<1x16x8xf32>
    %84 = arith.truncf %83 : vector<1x16x8xf32> to vector<1x16x8xbf16>
    "tpu.trace_start"() <{level = 10 : i32, message = "bkd,bnd->bkn"}> : () -> ()
    %cst_51 = arith.constant dense<0.000000e+00> : vector<1x8x16xf32>
    %85 = tpu.matmul %80, %82, %cst_51 {dimension_numbers = #tpu.dot_dimension_numbers<[2], [2], [1], [1], [0, 0, 0, 1, 1, 1], [0], [0]>} : vector<1x8x8xbf16>, vector<1x16x8xbf16>, vector<1x8x16xf32> -> vector<1x8x16xf32>
    "tpu.trace_stop"() : () -> ()
    %cst_52 = arith.constant 0.353553385 : f32
    %86 = vector.broadcast %cst_52 : f32 to vector<1x8x16xf32>
    %87 = arith.mulf %85, %86 : vector<1x8x16xf32>
    %cst_53 = arith.constant dense<0xFF800000> : vector<1x8xf32>
    %88 = vector.multi_reduction <maximumf>, %87, %cst_53 [2] : vector<1x8x16xf32> to vector<1x8xf32>
    %89 = vector.shape_cast %88 : vector<1x8xf32> to vector<1x8x1xf32>
    %90 = vector.broadcast %89 : vector<1x8x1xf32> to vector<1x8x16xf32>
    %91 = arith.subf %87, %90 : vector<1x8x16xf32>
    %92 = math.exp %91 : vector<1x8x16xf32>
    %cst_54 = arith.constant dense<0.000000e+00> : vector<1x8xf32>
    %93 = vector.multi_reduction <add>, %92, %cst_54 [2] : vector<1x8x16xf32> to vector<1x8xf32>
    %94 = vector.shape_cast %93 : vector<1x8xf32> to vector<1x8x1xf32>
    %95 = tpu.reciprocal %94 {approx = true} : vector<1x8x1xf32> -> vector<1x8x1xf32>
    %96 = vector.broadcast %95 : vector<1x8x1xf32> to vector<1x8x16xf32>
    %97 = arith.mulf %92, %96 : vector<1x8x16xf32>
    %98 = arith.truncf %97 : vector<1x8x16xf32> to vector<1x8x16xbf16>
    "tpu.trace_start"() <{level = 10 : i32, message = "bkn,bnd->bkd"}> : () -> ()
    %cst_55 = arith.constant dense<0.000000e+00> : vector<1x8x8xf32>
    %99 = tpu.matmul %98, %84, %cst_55 {dimension_numbers = #tpu.dot_dimension_numbers<[2], [1], [1], [2], [0, 0, 0, 1, 1, 2], [0], [0]>} : vector<1x8x16xbf16>, vector<1x16x8xbf16>, vector<1x8x8xf32> -> vector<1x8x8xf32>
    "tpu.trace_stop"() : () -> ()
    %100 = vector.shape_cast %99 : vector<1x8x8xf32> to vector<8x8xf32>
    %c0_56 = arith.constant 0 : index
    %c16 = arith.constant 16 : index
    %101 = vector.load %arg9[%c0_56, %c16] : memref<8x32xf32, #tpu.memory_space<vmem>>, vector<8x8xf32>
    tpu.vector_store %arg9[%c0_56, %c16], %100 {strides = array<i32>} : memref<8x32xf32, #tpu.memory_space<vmem>>, vector<8x8xf32>,
    %c3 = arith.constant 3 : index
    %c0_57 = arith.constant 0 : index
    %c0_58 = arith.constant 0 : index
    %102 = vector.load %arg3[%c3, %c0_57, %c0_58] : memref<4x32x8xbf16, #tpu.memory_space<vmem>>, vector<1x32x8xbf16>
    %103 = vector.shape_cast %102 : vector<1x32x8xbf16> to vector<32x8xbf16>
    %cst_59 = arith.constant dense<0.000000e+00> : vector<8x8xf32>
    %104 = tpu.matmul %2, %103, %cst_59 {dimension_numbers = #tpu.dot_dimension_numbers<[1], [0], [0], [1], [0, 0, 1, 1], [], []>} : vector<8x32xbf16>, vector<32x8xbf16>, vector<8x8xf32> -> vector<8x8xf32>
    %c3_60 = arith.constant 3 : index
    %c0_61 = arith.constant 0 : index
    %c0_62 = arith.constant 0 : index
    %105 = vector.load %arg4[%c3_60, %c0_61, %c0_62] : memref<4x32x8xbf16, #tpu.memory_space<vmem>>, vector<1x32x8xbf16>
    %106 = vector.shape_cast %105 : vector<1x32x8xbf16> to vector<32x8xbf16>
    %cst_63 = arith.constant dense<0.000000e+00> : vector<16x8xf32>
    %107 = tpu.matmul %5, %106, %cst_63 {dimension_numbers = #tpu.dot_dimension_numbers<[1], [0], [0], [1], [0, 0, 1, 1], [], []>} : vector<16x32xbf16>, vector<32x8xbf16>, vector<16x8xf32> -> vector<16x8xf32>
    %c3_64 = arith.constant 3 : index
    %c0_65 = arith.constant 0 : index
    %c0_66 = arith.constant 0 : index
    %108 = vector.load %arg5[%c3_64, %c0_65, %c0_66] : memref<4x32x8xbf16, #tpu.memory_space<vmem>>, vector<1x32x8xbf16>
    %109 = vector.shape_cast %108 : vector<1x32x8xbf16> to vector<32x8xbf16>
    %cst_67 = arith.constant dense<0.000000e+00> : vector<16x8xf32>
    %110 = tpu.matmul %5, %109, %cst_67 {dimension_numbers = #tpu.dot_dimension_numbers<[1], [0], [0], [1], [0, 0, 1, 1], [], []>} : vector<16x32xbf16>, vector<32x8xbf16>, vector<16x8xf32> -> vector<16x8xf32>
    %111 = vector.shape_cast %104 : vector<8x8xf32> to vector<1x8x8xf32>
    %112 = arith.truncf %111 : vector<1x8x8xf32> to vector<1x8x8xbf16>
    %113 = vector.shape_cast %107 : vector<16x8xf32> to vector<1x16x8xf32>
    %114 = arith.truncf %113 : vector<1x16x8xf32> to vector<1x16x8xbf16>
    %115 = vector.shape_cast %110 : vector<16x8xf32> to vector<1x16x8xf32>
    %116 = arith.truncf %115 : vector<1x16x8xf32> to vector<1x16x8xbf16>
    "tpu.trace_start"() <{level = 10 : i32, message = "bkd,bnd->bkn"}> : () -> ()
    %cst_68 = arith.constant dense<0.000000e+00> : vector<1x8x16xf32>
    %117 = tpu.matmul %112, %114, %cst_68 {dimension_numbers = #tpu.dot_dimension_numbers<[2], [2], [1], [1], [0, 0, 0, 1, 1, 1], [0], [0]>} : vector<1x8x8xbf16>, vector<1x16x8xbf16>, vector<1x8x16xf32> -> vector<1x8x16xf32>
    "tpu.trace_stop"() : () -> ()
    %cst_69 = arith.constant 0.353553385 : f32
    %118 = vector.broadcast %cst_69 : f32 to vector<1x8x16xf32>
    %119 = arith.mulf %117, %118 : vector<1x8x16xf32>
    %cst_70 = arith.constant dense<0xFF800000> : vector<1x8xf32>
    %120 = vector.multi_reduction <maximumf>, %119, %cst_70 [2] : vector<1x8x16xf32> to vector<1x8xf32>
    %121 = vector.shape_cast %120 : vector<1x8xf32> to vector<1x8x1xf32>
    %122 = vector.broadcast %121 : vector<1x8x1xf32> to vector<1x8x16xf32>
    %123 = arith.subf %119, %122 : vector<1x8x16xf32>
    %124 = math.exp %123 : vector<1x8x16xf32>
    %cst_71 = arith.constant dense<0.000000e+00> : vector<1x8xf32>
    %125 = vector.multi_reduction <add>, %124, %cst_71 [2] : vector<1x8x16xf32> to vector<1x8xf32>
    %126 = vector.shape_cast %125 : vector<1x8xf32> to vector<1x8x1xf32>
    %127 = tpu.reciprocal %126 {approx = true} : vector<1x8x1xf32> -> vector<1x8x1xf32>
    %128 = vector.broadcast %127 : vector<1x8x1xf32> to vector<1x8x16xf32>
    %129 = arith.mulf %124, %128 : vector<1x8x16xf32>
    %130 = arith.truncf %129 : vector<1x8x16xf32> to vector<1x8x16xbf16>
    "tpu.trace_start"() <{level = 10 : i32, message = "bkn,bnd->bkd"}> : () -> ()
    %cst_72 = arith.constant dense<0.000000e+00> : vector<1x8x8xf32>
    %131 = tpu.matmul %130, %116, %cst_72 {dimension_numbers = #tpu.dot_dimension_numbers<[2], [1], [1], [2], [0, 0, 0, 1, 1, 2], [0], [0]>} : vector<1x8x16xbf16>, vector<1x16x8xbf16>, vector<1x8x8xf32> -> vector<1x8x8xf32>
    "tpu.trace_stop"() : () -> ()
    %132 = vector.shape_cast %131 : vector<1x8x8xf32> to vector<8x8xf32>
    %c0_73 = arith.constant 0 : index
    %c24 = arith.constant 24 : index
    %133 = vector.load %arg9[%c0_73, %c24] : memref<8x32xf32, #tpu.memory_space<vmem>>, vector<8x8xf32>
    tpu.vector_store %arg9[%c0_73, %c24], %132 {strides = array<i32>} : memref<8x32xf32, #tpu.memory_space<vmem>>, vector<8x8xf32>,
    %c0_74 = arith.constant 0 : index
    %c0_75 = arith.constant 0 : index
    %134 = vector.load %arg9[%c0_74, %c0_75] : memref<8x32xf32, #tpu.memory_space<vmem>>, vector<8x32xf32>
    %135 = arith.truncf %134 : vector<8x32xf32> to vector<8x32xbf16>
    %c0_76 = arith.constant 0 : index
    %c0_77 = arith.constant 0 : index
    %136 = vector.load %arg6[%c0_76, %c0_77] : memref<32x32xbf16, #tpu.memory_space<vmem>>, vector<32x32xbf16>
    %cst_78 = arith.constant dense<0.000000e+00> : vector<8x32xf32>
    %137 = tpu.matmul %135, %136, %cst_78 {dimension_numbers = #tpu.dot_dimension_numbers<[1], [0], [0], [1], [0, 0, 1, 1], [], []>} : vector<8x32xbf16>, vector<32x32xbf16>, vector<8x32xf32> -> vector<8x32xf32>
    %c0_79 = arith.constant 0 : index
    %c0_80 = arith.constant 0 : index
    %138 = vector.load %arg7[%c0_79, %c0_80] : memref<1x32xf32, #tpu.memory_space<vmem>>, vector<1x32xf32>
    %139 = vector.broadcast %138 : vector<1x32xf32> to vector<8x32xf32>
    %140 = arith.addf %137, %139 : vector<8x32xf32>
    %141 = vector.shape_cast %140 : vector<8x32xf32> to vector<1x8x32xf32>
    %c0_81 = arith.constant 0 : index
    %c0_82 = arith.constant 0 : index
    %c0_83 = arith.constant 0 : index
    %142 = vector.load %arg8[%c0_81, %c0_82, %c0_83] : memref<1x8x32xf32, #tpu.memory_space<vmem>>, vector<1x8x32xf32>
    tpu.vector_store %arg8[%c0_81, %c0_82, %c0_83], %141 {strides = array<i32>} : memref<1x8x32xf32, #tpu.memory_space<vmem>>, vector<1x8x32xf32>,
    return
  }
  func.func @transform_0(%arg0: i32) -> (i32, i32, i32) {
    %c0_i32 = arith.constant 0 : i32
    %c0_i32_0 = arith.constant 0 : i32
    %c0_i32_1 = arith.constant 0 : i32
    return %arg0, %c0_i32, %c0_i32_0 : i32, i32, i32
  }
  func.func @transform_1(%arg0: i32) -> (i32, i32, i32) {
    %c0_i32 = arith.constant 0 : i32
    %c0_i32_0 = arith.constant 0 : i32
    %c0_i32_1 = arith.constant 0 : i32
    return %arg0, %c0_i32, %c0_i32_0 : i32, i32, i32
  }
  func.func @transform_2(%arg0: i32) -> (i32, i32, i32) {
    %c0_i32 = arith.constant 0 : i32
    %c0_i32_0 = arith.constant 0 : i32
    %c0_i32_1 = arith.constant 0 : i32
    %c0_i32_2 = arith.constant 0 : i32
    return %c0_i32, %c0_i32_0, %c0_i32_1 : i32, i32, i32
  }
  func.func @transform_3(%arg0: i32) -> (i32, i32, i32) {
    %c0_i32 = arith.constant 0 : i32
    %c0_i32_0 = arith.constant 0 : i32
    %c0_i32_1 = arith.constant 0 : i32
    %c0_i32_2 = arith.constant 0 : i32
    return %c0_i32, %c0_i32_0, %c0_i32_1 : i32, i32, i32
  }
  func.func @transform_4(%arg0: i32) -> (i32, i32, i32) {
    %c0_i32 = arith.constant 0 : i32
    %c0_i32_0 = arith.constant 0 : i32
    %c0_i32_1 = arith.constant 0 : i32
    %c0_i32_2 = arith.constant 0 : i32
    return %c0_i32, %c0_i32_0, %c0_i32_1 : i32, i32, i32
  }
  func.func @transform_5(%arg0: i32) -> (i32, i32) {
    %c0_i32 = arith.constant 0 : i32
    %c0_i32_0 = arith.constant 0 : i32
    %c0_i32_1 = arith.constant 0 : i32
    return %c0_i32, %c0_i32_0 : i32, i32
  }
  func.func @transform_6(%arg0: i32) -> (i32, i32) {
    %c0_i32 = arith.constant 0 : i32
    %c0_i32_0 = arith.constant 0 : i32
    %c0_i32_1 = arith.constant 0 : i32
    return %c0_i32, %c0_i32_0 : i32, i32
  }
  func.func @transform_7(%arg0: i32) -> (i32, i32, i32) {
    %c0_i32 = arith.constant 0 : i32
    %c0_i32_0 = arith.constant 0 : i32
    %c0_i32_1 = arith.constant 0 : i32
    return %arg0, %c0_i32, %c0_i32_0 : i32, i32, i32
  }
}

</mosaic_0001>

<llo_original>
// kernel: tpu_custom_call.1
$region0: #{tpu_custom_call.1}
  #allocation0 [shape = 'u32[]', space=smem, size = 0x4, offset = 0x4, fixed_abs, tag = 'smem constant byte address 0x4 - core index']
  #allocation1 [shape = 'u32[144,128]{1,0:T(1,128)}', space=vmem, size = 0x12000, scoped, tag = 'internal scratch']
  #allocation2 [shape = 'f32[8,32]{1,0:T(8,128)}', space=vmem, size = 0x1000, scoped, tag = 'scratch operand']
  %s0 = inlined_call_operand.vmem [shape: f32[2,8,32], index: 0, kind: input, shape index: {}]
  %s1 = inlined_call_operand.vmem [shape: f32[2,16,32], index: 1, kind: input, shape index: {}]
  %s2 = inlined_call_operand.vmem [shape: bf16[4,32,8], index: 2, kind: input, shape index: {}]
  %s3 = inlined_call_operand.vmem [shape: bf16[4,32,8], index: 3, kind: input, shape index: {}]
  %s4 = inlined_call_operand.vmem [shape: bf16[4,32,8], index: 4, kind: input, shape index: {}]
  %s5 = inlined_call_operand.vmem [shape: bf16[32,32], index: 5, kind: input, shape index: {}]
  %s6 = inlined_call_operand.vmem [shape: f32[1,32], index: 6, kind: input, shape index: {}]
  %s7 = inlined_call_operand.hbm [shape: f32[2,8,32], index: 7, kind: output, shape index: {}]
  %s8 = sld [smem:[#allocation0]]
  $region61: #{tpu_custom_call.1} parent=0
    _
  %s10 = ssub.s32 1, %s8
  %s11 = scalar_select 0, %s10, %s8
  $region1: #{tpu_custom_call.1} parent=0
    #allocation3 [shape = 'u8[8192]{0}', space=vmem, size = 0x2000, scoped, tag = 'output window, operand 0']
    #allocation4 [shape = 's32[2]{0}', space=sflag, size = 0x8, scoped, tag = 'scoped memory for tpu_custom_call.1']
    %12 = vsyncpa [#allocation4], 0
    %s13 = scalar_lea.sflag [#allocation4], 1
    %14 = vsyncpa %s13, 0
    loop: start=0, step=1, limit=4
    $region2: #{tpu_custom_call.1} parent=1 // loop_pre_header
      _
    $region3: #{tpu_custom_call.1} parent=1 // loop_header
      %s16 = sphi 0, %s20
      %p17 = scmp.ge.s32.totalorder %s16, 4
      %s26 = sphi 0, %s28
      %s29 = sphi 0, %s26
      %s30 = sphi 0, %s29
      %s46 = sphi 0, %s30
      %s52 = sphi 0, %s54
      %s55 = sphi 0, %s52
      %s56 = sphi 0, %s55
      %s72 = sphi 0, %s56
      %s76 = sphi 0, %s76
      %s78 = sphi 0, %s76
      %s79 = sphi 0, %s78
      %s93 = sphi 0, %s79
      %s97 = sphi 0, %s97
      %s99 = sphi 0, %s97
      %s100 = sphi 0, %s99
      %s114 = sphi 0, %s100
      %s118 = sphi 0, %s118
      %s120 = sphi 0, %s118
      %s121 = sphi 0, %s120
      %s135 = sphi 0, %s121
      %s139 = sphi 0, %s139
      %s141 = sphi 0, %s139
      %s142 = sphi 0, %s141
      %s156 = sphi 0, %s142
      %s160 = sphi 0, %s160
      %s162 = sphi 0, %s160
      %s163 = sphi 0, %s162
      %s177 = sphi 0, %s163
      %s183 = sphi 0, %s185
      %s186 = sphi 0, %s183
      %s187 = sphi 0, %s186
      %s203 = sphi 0, %s187
    $region4: #{tpu_custom_call.1} parent=1 // loop_header_branch
      %19 = sbr.rel (%p17) target = $region8
    $region5: #{tpu_custom_call.1} parent=1 // loop_body
      %s21 = ssub.s32 %s16, 1
      %s22 = ssub.s32 %s16, 2
      %s23 = sadd.s32 %s16, 1
      %s24 = ssub.s32 %s16, %s23
      %p25 = scmp.eq.s32.totalorder %s24, 0
      %s27 = sadd.s32 %s26, 1
      %s28 = scalar_select %p25, %s26, %s27
      %p31 = pneg %p25
      %p32 = scmp.eq.s32.totalorder %s16, 1
      %p33 = por %p31, %p32
      %p34 = scmp.ne.s32.totalorder %s26, %s29
      %p35 = scmp.eq.s32.totalorder %s16, 0
      %p36 = por %p34, %p35
      %p37 = scmp.ne.s32.totalorder %s26, %s29
      %p38 = scmp.eq.s32.totalorder %s21, 1
      %p39 = por %p37, %p38
      %p40 = scmp.ne.s32.totalorder %s29, %s30
      %p41 = scmp.eq.s32.totalorder %s21, 0
      %p42 = por %p40, %p41
      %p43 = scmp.ne.s32.totalorder %s29, %s30
      %p44 = scmp.eq.s32.totalorder %s22, 1
      %p45 = por %p43, %p44
      %p47 = scmp.ne.s32.totalorder %s30, %s46
      %p48 = scmp.eq.s32.totalorder %s22, 0
      %p49 = por %p47, %p48
      %s50 = ssub.s32 %s16, %s23
      %p51 = scmp.eq.s32.totalorder %s50, 0
      %s53 = sadd.s32 %s52, 1
      %s54 = scalar_select %p51, %s52, %s53
      %p57 = pneg %p51
      %p58 = scmp.eq.s32.totalorder %s16, 1
      %p59 = por %p57, %p58
      %p60 = scmp.ne.s32.totalorder %s52, %s55
      %p61 = scmp.eq.s32.totalorder %s16, 0
      %p62 = por %p60, %p61
      %p63 = scmp.ne.s32.totalorder %s52, %s55
      %p64 = scmp.eq.s32.totalorder %s21, 1
      %p65 = por %p63, %p64
      %p66 = scmp.ne.s32.totalorder %s55, %s56
      %p67 = scmp.eq.s32.totalorder %s21, 0
      %p68 = por %p66, %p67
      %p69 = scmp.ne.s32.totalorder %s55, %s56
      %p70 = scmp.eq.s32.totalorder %s22, 1
      %p71 = por %p69, %p70
      %p73 = scmp.ne.s32.totalorder %s56, %s72
      %p74 = scmp.eq.s32.totalorder %s22, 0
      %p75 = por %p73, %p74
      %s77 = sadd.s32 %s76, 1
      %p80 = scmp.eq.s32.totalorder %s16, 1
      %p81 = scmp.ne.s32.totalorder %s76, %s78
      %p82 = scmp.eq.s32.totalorder %s16, 0
      %p83 = por %p81, %p82
      %p84 = scmp.ne.s32.totalorder %s76, %s78
      %p85 = scmp.eq.s32.totalorder %s21, 1
      %p86 = por %p84, %p85
      %p87 = scmp.ne.s32.totalorder %s78, %s79
      %p88 = scmp.eq.s32.totalorder %s21, 0
      %p89 = por %p87, %p88
      %p90 = scmp.ne.s32.totalorder %s78, %s79
      %p91 = scmp.eq.s32.totalorder %s22, 1
      %p92 = por %p90, %p91
      %p94 = scmp.ne.s32.totalorder %s79, %s93
      %p95 = scmp.eq.s32.totalorder %s22, 0
      %p96 = por %p94, %p95
      %s98 = sadd.s32 %s97, 1
      %p101 = scmp.eq.s32.totalorder %s16, 1
      %p102 = scmp.ne.s32.totalorder %s97, %s99
      %p103 = scmp.eq.s32.totalorder %s16, 0
      %p104 = por %p102, %p103
      %p105 = scmp.ne.s32.totalorder %s97, %s99
      %p106 = scmp.eq.s32.totalorder %s21, 1
      %p107 = por %p105, %p106
      %p108 = scmp.ne.s32.totalorder %s99, %s100
      %p109 = scmp.eq.s32.totalorder %s21, 0
      %p110 = por %p108, %p109
      %p111 = scmp.ne.s32.totalorder %s99, %s100
      %p112 = scmp.eq.s32.totalorder %s22, 1
      %p113 = por %p111, %p112
      %p115 = scmp.ne.s32.totalorder %s100, %s114
      %p116 = scmp.eq.s32.totalorder %s22, 0
      %p117 = por %p115, %p116
      %s119 = sadd.s32 %s118, 1
      %p122 = scmp.eq.s32.totalorder %s16, 1
      %p123 = scmp.ne.s32.totalorder %s118, %s120
      %p124 = scmp.eq.s32.totalorder %s16, 0
      %p125 = por %p123, %p124
      %p126 = scmp.ne.s32.totalorder %s118, %s120
      %p127 = scmp.eq.s32.totalorder %s21, 1
      %p128 = por %p126, %p127
      %p129 = scmp.ne.s32.totalorder %s120, %s121
      %p130 = scmp.eq.s32.totalorder %s21, 0
      %p131 = por %p129, %p130
      %p132 = scmp.ne.s32.totalorder %s120, %s121
      %p133 = scmp.eq.s32.totalorder %s22, 1
      %p134 = por %p132, %p133
      %p136 = scmp.ne.s32.totalorder %s121, %s135
      %p137 = scmp.eq.s32.totalorder %s22, 0
      %p138 = por %p136, %p137
      %s140 = sadd.s32 %s139, 1
      %p143 = scmp.eq.s32.totalorder %s16, 1
      %p144 = scmp.ne.s32.totalorder %s139, %s141
      %p145 = scmp.eq.s32.totalorder %s16, 0
      %p146 = por %p144, %p145
      %p147 = scmp.ne.s32.totalorder %s139, %s141
      %p148 = scmp.eq.s32.totalorder %s21, 1
      %p149 = por %p147, %p148
      %p150 = scmp.ne.s32.totalorder %s141, %s142
      %p151 = scmp.eq.s32.totalorder %s21, 0
      %p152 = por %p150, %p151
      %p153 = scmp.ne.s32.totalorder %s141, %s142
      %p154 = scmp.eq.s32.totalorder %s22, 1
      %p155 = por %p153, %p154
      %p157 = scmp.ne.s32.totalorder %s142, %s156
      %p158 = scmp.eq.s32.totalorder %s22, 0
      %p159 = por %p157, %p158
      %s161 = sadd.s32 %s160, 1
      %p164 = scmp.eq.s32.totalorder %s16, 1
      %p165 = scmp.ne.s32.totalorder %s160, %s162
      %p166 = scmp.eq.s32.totalorder %s16, 0
      %p167 = por %p165, %p166
      %p168 = scmp.ne.s32.totalorder %s160, %s162
      %p169 = scmp.eq.s32.totalorder %s21, 1
      %p170 = por %p168, %p169
      %p171 = scmp.ne.s32.totalorder %s162, %s163
      %p172 = scmp.eq.s32.totalorder %s21, 0
      %p173 = por %p171, %p172
      %p174 = scmp.ne.s32.totalorder %s162, %s163
      %p175 = scmp.eq.s32.totalorder %s22, 1
      %p176 = por %p174, %p175
      %p178 = scmp.ne.s32.totalorder %s163, %s177
      %p179 = scmp.eq.s32.totalorder %s22, 0
      %p180 = por %p178, %p179
      %s181 = ssub.s32 %s16, %s23
      %p182 = scmp.eq.s32.totalorder %s181, 0
      %s184 = sadd.s32 %s183, 1
      %s185 = scalar_select %p182, %s183, %s184
      %p188 = pneg %p182
      %p189 = scmp.eq.s32.totalorder %s16, 1
      %p190 = por %p188, %p189
      %p191 = scmp.ne.s32.totalorder %s183, %s186
      %p192 = scmp.eq.s32.totalorder %s16, 0
      %p193 = por %p191, %p192
      %p194 = scmp.ne.s32.totalorder %s183, %s186
      %p195 = scmp.eq.s32.totalorder %s21, 1
      %p196 = por %p194, %p195
      %p197 = scmp.ne.s32.totalorder %s186, %s187
      %p198 = scmp.eq.s32.totalorder %s21, 0
      %p199 = por %p197, %p198
      %p200 = scmp.ne.s32.totalorder %s186, %s187
      %p201 = scmp.eq.s32.totalorder %s22, 1
      %p202 = por %p200, %p201
      %p204 = scmp.ne.s32.totalorder %s187, %s203
      %p205 = scmp.eq.s32.totalorder %s22, 0
      %p206 = por %p204, %p205
      %p207 = scmp.le.s32.totalorder 1, %s16
      %p208 = scmp.lt.s32.totalorder %s16, 3
      %p209 = pnand %p207, %p208
      %p210 = pneg %p209
      // Predicated region
      $region9: #{tpu_custom_call.1} parent=5 // pred_check
        _
      $region10: #{tpu_custom_call.1} parent=5 // pred_check_branch
        %212 = sbr.rel (%p209) target = $region12
      $region11: #{tpu_custom_call.1} parent=5 // pred_region
        %s213 = ssub.s32 %s16, 1
        // Predicated region
        $region13: #{tpu_custom_call.1} parent=11 // pred_check
          %p214 = pneg %p89
        $region14: #{tpu_custom_call.1} parent=11 // pred_check_branch
          %216 = sbr.rel (%p214) target = $region16
        $region15: #{tpu_custom_call.1} parent=11 // pred_region
          _
        $region16: #{tpu_custom_call.1} parent=11 // pred_fallthru
          _
        // Predicated region
        $region17: #{tpu_custom_call.1} parent=11 // pred_check
          %p217 = pneg %p110
        $region18: #{tpu_custom_call.1} parent=11 // pred_check_branch
          %219 = sbr.rel (%p217) target = $region20
        $region19: #{tpu_custom_call.1} parent=11 // pred_region
          _
        $region20: #{tpu_custom_call.1} parent=11 // pred_fallthru
          _
        // Predicated region
        $region21: #{tpu_custom_call.1} parent=11 // pred_check
          %p220 = pneg %p131
        $region22: #{tpu_custom_call.1} parent=11 // pred_check_branch
          %222 = sbr.rel (%p220) target = $region24
        $region23: #{tpu_custom_call.1} parent=11 // pred_region
          _
        $region24: #{tpu_custom_call.1} parent=11 // pred_fallthru
          _
        // Predicated region
        $region25: #{tpu_custom_call.1} parent=11 // pred_check
          %p223 = pneg %p152
        $region26: #{tpu_custom_call.1} parent=11 // pred_check_branch
          %225 = sbr.rel (%p223) target = $region28
        $region27: #{tpu_custom_call.1} parent=11 // pred_region
          _
        $region28: #{tpu_custom_call.1} parent=11 // pred_fallthru
          _
        // Predicated region
        $region29: #{tpu_custom_call.1} parent=11 // pred_check
          %p226 = pneg %p173
        $region30: #{tpu_custom_call.1} parent=11 // pred_check_branch
          %228 = sbr.rel (%p226) target = $region32
        $region31: #{tpu_custom_call.1} parent=11 // pred_region
          _
        $region32: #{tpu_custom_call.1} parent=11 // pred_fallthru
          _
      $region12: #{tpu_custom_call.1} parent=5 // pred_fallthru
        _
      %p229 = scmp.lt.s32.totalorder %s16, 2
      // Predicated region
      $region33: #{tpu_custom_call.1} parent=5 // pred_check
        %p230 = pneg %p229
      $region34: #{tpu_custom_call.1} parent=5 // pred_check_branch
        %232 = sbr.rel (%p230) target = $region36
      $region35: #{tpu_custom_call.1} parent=5 // pred_region
        // Predicated region
        $region37: #{tpu_custom_call.1} parent=35 // pred_check
          %p233 = pneg %p36
        $region38: #{tpu_custom_call.1} parent=35 // pred_check_branch
          %235 = sbr.rel (%p233) target = $region40
        $region39: #{tpu_custom_call.1} parent=35 // pred_region
          %p236 = scmp.lt.s32.totalorder %s16, 1
          %s237 = scalar_select %p236, %s16, 1
          %s238 = smul.addr %s237, 8
          %s239 = scalar_lea.vmem %s0, %s238
        $region40: #{tpu_custom_call.1} parent=35 // pred_fallthru
          _
        // Predicated region
        $region41: #{tpu_custom_call.1} parent=35 // pred_check
          %p240 = pneg %p62
        $region42: #{tpu_custom_call.1} parent=35 // pred_check_branch
          %242 = sbr.rel (%p240) target = $region44
        $region43: #{tpu_custom_call.1} parent=35 // pred_region
          %p243 = scmp.lt.s32.totalorder %s16, 1
          %s244 = scalar_select %p243, %s16, 1
          %s245 = smul.addr %s244, 2
          %s246 = smul.addr %s245, 8
          %s247 = scalar_lea.vmem %s1, %s246
        $region44: #{tpu_custom_call.1} parent=35 // pred_fallthru
          _
      $region36: #{tpu_custom_call.1} parent=5 // pred_fallthru
        _
      %p248 = scmp.le.s32.totalorder 1, %s16
      %p249 = scmp.lt.s32.totalorder %s16, 3
      %p250 = pnand %p248, %p249
      %p251 = pneg %p250
      // Predicated region
      $region45: #{tpu_custom_call.1} parent=5 // pred_check
        _
      $region46: #{tpu_custom_call.1} parent=5 // pred_check_branch
        %253 = sbr.rel (%p250) target = $region48
      $region47: #{tpu_custom_call.1} parent=5 // pred_region
        %s254 = ssub.s32 %s16, 1
        %p255 = scmp.lt.s32.totalorder %s21, 1
        %s256 = scalar_select %p255, %s21, 1
        %s257 = smul.addr %s256, 8
        %s258 = scalar_lea.vmem %s0, %s257
        %p259 = pneg %p42
        %p260 = pneg %p39
        %p261 = scmp.lt.s32.totalorder %s21, 1
        %s262 = scalar_select %p261, %s21, 1
        %s263 = smul.addr %s262, 2
        %s264 = smul.addr %s263, 8
        %s265 = scalar_lea.vmem %s1, %s264
        %p266 = pneg %p68
        %p267 = pneg %p65
        %p268 = pneg %p89
        %p269 = pneg %p86
        %p270 = pneg %p110
        %p271 = pneg %p107
        %p272 = pneg %p131
        %p273 = pneg %p128
        %p274 = pneg %p152
        %p275 = pneg %p149
        %p276 = pneg %p173
        %p277 = pneg %p170
        %p278 = pneg %p199
        %p279 = pneg %p196
        %s280 = sand.u32 %s186, 1
        %s281 = scalar_lea.sflag [#allocation4], %s280
        %s282 = sand.u32 %s186, 1
        %s283 = smul.addr %s282, 8
        %s284 = scalar_lea.vmem [#allocation3], %s283
        %p285 = scmp.lt.s32.totalorder %s21, 1
        %s286 = scalar_select %p285, %s21, 1
        %s287 = smul.addr %s286, 8
        %s288 = scalar_lea.vmem %s0, %s287
        %p289 = scmp.lt.s32.totalorder %s21, 1
        %s290 = scalar_select %p289, %s21, 1
        %s291 = smul.addr %s290, 2
        %s292 = smul.addr %s291, 8
        %s293 = scalar_lea.vmem %s1, %s292
        %v295 = vld [vmem:[%s288] sm:$0xff]
        %v296 = vpack.c.bf16 %v295, %v295
        %v297 = vld [vmem:[%s293] sm:$0xff]
        %v298 = vld [vmem:[%s293 + $0x8] sm:$0xff]
        %v299 = vpack.c.bf16 %v298, %v297
        %v300 = vld [vmem:[%s2] sm:$0xf]
        %v301 = vld [vmem:[%s2 + $0x4] sm:$0xf]
        %v302 = vld [vmem:[%s2 + $0x8] sm:$0xf]
        %v303 = vld [vmem:[%s2 + $0xc] sm:$0xf]
        %v308 = vunpack.c.l.b16 %v300
        %v309 = vunpack.c.l.b16 %v301
        %v310 = vunpack.c.l.b16 %v302
        %v311 = vunpack.c.l.b16 %v303
        %v312 = vpack.c.b16 %v309, %v308
        %v313 = vpack.c.b16 %v311, %v310
        %vm316 = vcmask 261120
        %v318 = vsel %vm316, %v296, 0
        %320 = vmatprep.subr.bf16.mxu0 0
        %321 = vmatpush1.bf16.msra.mxu0 %v312
        %322 = vmatprep.subr.bf16.mxu0 0
        %323 = vmatpush1.bf16.msra.mxu0 %v313
        %324 = vmatprep.subr.bf16.mxu0 0
        %325 = vmatpush1.bf16.msra.mxu0 0
        %326 = vmatprep.subr.bf16.mxu0 0
        %327 = vmatpush1.bf16.msra.mxu0 0
        %328 = vmatprep.subr.bf16.mxu0 0
        %329 = vmatpush1.bf16.msra.mxu0 0
        %330 = vmatprep.subr.bf16.mxu0 0
        %331 = vmatpush1.bf16.msra.mxu0 0
        %332 = vmatprep.subr.bf16.mxu0 0
        %333 = vmatpush1.bf16.msra.mxu0 0
        %334 = vmatprep.subr.bf16.mxu0 0
        %335 = vmatpush1.bf16.msra.mxu0 0
        %336 = vmatprep.subr.bf16.mxu0 0
        %337 = vmatpush1.bf16.msra.mxu0 0
        %338 = vmatprep.subr.bf16.mxu0 0
        %339 = vmatpush1.bf16.msra.mxu0 0
        %340 = vmatprep.subr.bf16.mxu0 0
        %341 = vmatpush1.bf16.msra.mxu0 0
        %342 = vmatprep.subr.bf16.mxu0 0
        %343 = vmatpush1.bf16.msra.mxu0 0
        %344 = vmatprep.subr.bf16.mxu0 0
        %345 = vmatpush1.bf16.msra.mxu0 0
        %346 = vmatprep.subr.bf16.mxu0 0
        %347 = vmatpush1.bf16.msra.mxu0 0
        %348 = vmatprep.subr.bf16.mxu0 0
        %349 = vmatpush1.bf16.msra.mxu0 0
        %350 = vmatprep.subr.bf16.mxu0 0
        %351 = vmatpush1.bf16.msra.mxu0 0
        %352 = vmatprep.mubr.bf16.mxu0 0
        %353 = vmatmul.mubr.bf16.gmra.mrb[0].mxu0 %v318
        %v354 = vpop.f32.mrb[0].mxu0
        %v355 = vadd.f32 0.0, %v354
        %v356 = vpop.f32.mrb[0].mxu0
        %v357 = vpop.f32.mrb[0].mxu0
        %v358 = vpop.f32.mrb[0].mxu0
        %359 = vdwg.mxu0
        %v360 = vld [vmem:[%s3] sm:$0xf]
        %v361 = vld [vmem:[%s3 + $0x4] sm:$0xf]
        %v362 = vld [vmem:[%s3 + $0x8] sm:$0xf]
        %v363 = vld [vmem:[%s3 + $0xc] sm:$0xf]
        %v368 = vunpack.c.l.b16 %v360
        %v369 = vunpack.c.l.b16 %v361
        %v370 = vunpack.c.l.b16 %v362
        %v371 = vunpack.c.l.b16 %v363
        %v372 = vpack.c.b16 %v369, %v368
        %v373 = vpack.c.b16 %v371, %v370
        %v377 = vsel %vm316, %v299, 0
        %379 = vmatprep.subr.bf16.mxu0 0
        %380 = vmatpush1.bf16.msra.mxu0 %v372
        %381 = vmatprep.subr.bf16.mxu0 0
        %382 = vmatpush1.bf16.msra.mxu0 %v373
        %383 = vmatprep.subr.bf16.mxu0 0
        %384 = vmatpush1.bf16.msra.mxu0 0
        %385 = vmatprep.subr.bf16.mxu0 0
        %386 = vmatpush1.bf16.msra.mxu0 0
        %387 = vmatprep.subr.bf16.mxu0 0
        %388 = vmatpush1.bf16.msra.mxu0 0
        %389 = vmatprep.subr.bf16.mxu0 0
        %390 = vmatpush1.bf16.msra.mxu0 0
        %391 = vmatprep.subr.bf16.mxu0 0
        %392 = vmatpush1.bf16.msra.mxu0 0
        %393 = vmatprep.subr.bf16.mxu0 0
        %394 = vmatpush1.bf16.msra.mxu0 0
        %395 = vmatprep.subr.bf16.mxu0 0
        %396 = vmatpush1.bf16.msra.mxu0 0
        %397 = vmatprep.subr.bf16.mxu0 0
        %398 = vmatpush1.bf16.msra.mxu0 0
        %399 = vmatprep.subr.bf16.mxu0 0
        %400 = vmatpush1.bf16.msra.mxu0 0
        %401 = vmatprep.subr.bf16.mxu0 0
        %402 = vmatpush1.bf16.msra.mxu0 0
        %403 = vmatprep.subr.bf16.mxu0 0
        %404 = vmatpush1.bf16.msra.mxu0 0
        %405 = vmatprep.subr.bf16.mxu0 0
        %406 = vmatpush1.bf16.msra.mxu0 0
        %407 = vmatprep.subr.bf16.mxu0 0
        %408 = vmatpush1.bf16.msra.mxu0 0
        %409 = vmatprep.subr.bf16.mxu0 0
        %410 = vmatpush1.bf16.msra.mxu0 0
        %411 = vmatprep.mubr.bf16.mxu0 0
        %412 = vmatmul.mubr.bf16.gmra.mrb[0].mxu0 %v377
        %v413 = vpop.f32.mrb[0].mxu0
        %v414 = vadd.f32 0.0, %v413
        %v415 = vpop.f32.mrb[0].mxu0
        %v416 = vpop.f32.mrb[0].mxu0
        %v417 = vadd.f32 0.0, %v416
        %v418 = vpop.f32.mrb[0].mxu0
        %419 = vdwg.mxu0
        %v420 = vld [vmem:[%s4] sm:$0xf]
        %v421 = vld [vmem:[%s4 + $0x4] sm:$0xf]
        %v422 = vld [vmem:[%s4 + $0x8] sm:$0xf]
        %v423 = vld [vmem:[%s4 + $0xc] sm:$0xf]
        %v428 = vunpack.c.l.b16 %v420
        %v429 = vunpack.c.l.b16 %v421
        %v430 = vunpack.c.l.b16 %v422
        %v431 = vunpack.c.l.b16 %v423
        %v432 = vpack.c.b16 %v429, %v428
        %v433 = vpack.c.b16 %v431, %v430
        %436 = vmatprep.subr.bf16.mxu0 0
        %437 = vmatpush1.bf16.msra.mxu0 %v432
        %438 = vmatprep.subr.bf16.mxu0 0
        %439 = vmatpush1.bf16.msra.mxu0 %v433
        %440 = vmatprep.subr.bf16.mxu0 0
        %441 = vmatpush1.bf16.msra.mxu0 0
        %442 = vmatprep.subr.bf16.mxu0 0
        %443 = vmatpush1.bf16.msra.mxu0 0
        %444 = vmatprep.subr.bf16.mxu0 0
        %445 = vmatpush1.bf16.msra.mxu0 0
        %446 = vmatprep.subr.bf16.mxu0 0
        %447 = vmatpush1.bf16.msra.mxu0 0
        %448 = vmatprep.subr.bf16.mxu0 0
        %449 = vmatpush1.bf16.msra.mxu0 0
        %450 = vmatprep.subr.bf16.mxu0 0
        %451 = vmatpush1.bf16.msra.mxu0 0
        %452 = vmatprep.subr.bf16.mxu0 0
        %453 = vmatpush1.bf16.msra.mxu0 0
        %454 = vmatprep.subr.bf16.mxu0 0
        %455 = vmatpush1.bf16.msra.mxu0 0
        %456 = vmatprep.subr.bf16.mxu0 0
        %457 = vmatpush1.bf16.msra.mxu0 0
        %458 = vmatprep.subr.bf16.mxu0 0
        %459 = vmatpush1.bf16.msra.mxu0 0
        %460 = vmatprep.subr.bf16.mxu0 0
        %461 = vmatpush1.bf16.msra.mxu0 0
        %462 = vmatprep.subr.bf16.mxu0 0
        %463 = vmatpush1.bf16.msra.mxu0 0
        %464 = vmatprep.subr.bf16.mxu0 0
        %465 = vmatpush1.bf16.msra.mxu0 0
        %466 = vmatprep.subr.bf16.mxu0 0
        %467 = vmatpush1.bf16.msra.mxu0 0
        %468 = vmatprep.mubr.bf16.mxu0 0
        %469 = vmatmul.mubr.bf16.gmra.mrb[0].mxu0 %v377
        %v470 = vpop.f32.mrb[0].mxu0
        %v471 = vadd.f32 0.0, %v470
        %v472 = vpop.f32.mrb[0].mxu0
        %v473 = vpop.f32.mrb[0].mxu0
        %v474 = vadd.f32 0.0, %v473
        %v475 = vpop.f32.mrb[0].mxu0
        %476 = vdwg.mxu0
        %v477 = vpack.c.bf16 %v355, %v355
        %v478 = vpack.c.bf16 %v417, %v414
        %v479 = vpack.c.bf16 %v474, %v471
        %vm480 = vcmask 64512
        %v482 = vsel %vm480, %v477, 0
        %v485 = vsel %vm480, %v478, 0
        %487 = vmatprep.subr.bf16.mxu0 0
        %488 = vmatpush1.bf16.xpose.msra.mxu0 %v485
        %489 = vmatprep.subr.bf16.mxu0 0
        %490 = vmatpush1.bf16.xpose.msra.mxu0 0
        %491 = vmatprep.subr.bf16.mxu0 0
        %492 = vmatpush1.bf16.xpose.msra.mxu0 0
        %493 = vmatprep.subr.bf16.mxu0 0
        %494 = vmatpush1.bf16.xpose.msra.mxu0 0
        %495 = vmatprep.subr.bf16.mxu0 0
        %496 = vmatpush1.bf16.xpose.msra.mxu0 0
        %497 = vmatprep.subr.bf16.mxu0 0
        %498 = vmatpush1.bf16.xpose.msra.mxu0 0
        %499 = vmatprep.subr.bf16.mxu0 0
        %500 = vmatpush1.bf16.xpose.msra.mxu0 0
        %501 = vmatprep.subr.bf16.mxu0 0
        %502 = vmatpush1.bf16.xpose.msra.mxu0 0
        %503 = vmatprep.subr.bf16.mxu0 0
        %504 = vmatpush1.bf16.xpose.msra.mxu0 0
        %505 = vmatprep.subr.bf16.mxu0 0
        %506 = vmatpush1.bf16.xpose.msra.mxu0 0
        %507 = vmatprep.subr.bf16.mxu0 0
        %508 = vmatpush1.bf16.xpose.msra.mxu0 0
        %509 = vmatprep.subr.bf16.mxu0 0
        %510 = vmatpush1.bf16.xpose.msra.mxu0 0
        %511 = vmatprep.subr.bf16.mxu0 0
        %512 = vmatpush1.bf16.xpose.msra.mxu0 0
        %513 = vmatprep.subr.bf16.mxu0 0
        %514 = vmatpush1.bf16.xpose.msra.mxu0 0
        %515 = vmatprep.subr.bf16.mxu0 0
        %516 = vmatpush1.bf16.xpose.msra.mxu0 0
        %517 = vmatprep.subr.bf16.mxu0 0
        %518 = vmatpush1.bf16.xpose.msra.mxu0 0
        %519 = vmatprep.mubr.bf16.mxu0 0
        %520 = vmatmul.mubr.bf16.gmra.mrb[0].mxu0 %v482
        %v521 = vpop.f32.mrb[0].mxu0
        %v522 = vadd.f32 0.0, %v521
        %v523 = vpop.f32.mrb[0].mxu0
        %v524 = vpop.f32.mrb[0].mxu0
        %v525 = vpop.f32.mrb[0].mxu0
        %526 = vdwg.mxu0
        %v527 = vmul.f32 %v522, 0.35355338
        %vm528 = vcmask 130048
        %v529 = vsel %vm528, %v527, -inf
        %530 = vmax.xlane.f32.xlu0 %v529
        %v531 = vpop.xlane.xlu0 %530
        %v532 = vsub.f32 %v527, %v531
        %v533 = vmul.f32 %v532, 1.442695
        %v534 = vpow.pop %v533
        %v535 = vsel %vm528, %v534, 0.0
        %536 = vadd.xlane.f32.xlu0 %v535
        %v537 = vpop.xlane.xlu0 %536
        %v538 = vrcp.pop %v537
        %v539 = vmul.f32 %v534, %v538
        %v540 = vpack.c.bf16 %v539, %v539
        %v542 = vsel %vm528, %v540, 0
        %544 = vmatprep.subr.bf16.mxu0 0
        %545 = vmatpush1.bf16.msra.mxu0 %v479
        %546 = vmatprep.subr.bf16.mxu0 0
        %547 = vmatpush1.bf16.msra.mxu0 0
        %548 = vmatprep.subr.bf16.mxu0 0
        %549 = vmatpush1.bf16.msra.mxu0 0
        %550 = vmatprep.subr.bf16.mxu0 0
        %551 = vmatpush1.bf16.msra.mxu0 0
        %552 = vmatprep.subr.bf16.mxu0 0
        %553 = vmatpush1.bf16.msra.mxu0 0
        %554 = vmatprep.subr.bf16.mxu0 0
        %555 = vmatpush1.bf16.msra.mxu0 0
        %556 = vmatprep.subr.bf16.mxu0 0
        %557 = vmatpush1.bf16.msra.mxu0 0
        %558 = vmatprep.subr.bf16.mxu0 0
        %559 = vmatpush1.bf16.msra.mxu0 0
        %560 = vmatprep.subr.bf16.mxu0 0
        %561 = vmatpush1.bf16.msra.mxu0 0
        %562 = vmatprep.subr.bf16.mxu0 0
        %563 = vmatpush1.bf16.msra.mxu0 0
        %564 = vmatprep.subr.bf16.mxu0 0
        %565 = vmatpush1.bf16.msra.mxu0 0
        %566 = vmatprep.subr.bf16.mxu0 0
        %567 = vmatpush1.bf16.msra.mxu0 0
        %568 = vmatprep.subr.bf16.mxu0 0
        %569 = vmatpush1.bf16.msra.mxu0 0
        %570 = vmatprep.subr.bf16.mxu0 0
        %571 = vmatpush1.bf16.msra.mxu0 0
        %572 = vmatprep.subr.bf16.mxu0 0
        %573 = vmatpush1.bf16.msra.mxu0 0
        %574 = vmatprep.subr.bf16.mxu0 0
        %575 = vmatpush1.bf16.msra.mxu0 0
        %576 = vmatprep.mubr.bf16.mxu0 0
        %577 = vmatmul.mubr.bf16.gmra.mrb[0].mxu0 %v542
        %v578 = vpop.f32.mrb[0].mxu0
        %v579 = vadd.f32 0.0, %v578
        %v580 = vpop.f32.mrb[0].mxu0
        %v581 = vpop.f32.mrb[0].mxu0
        %v582 = vpop.f32.mrb[0].mxu0
        %583 = vdwg.mxu0
        %584 = vst.msk [vmem:[#allocation2] sm:$0xff] %vm480, %v579
        %s585 = scalar_lea.vmem %s2, 16
        %v586 = vld [vmem:[%s585] sm:$0xf]
        %v587 = vld [vmem:[%s585 + $0x4] sm:$0xf]
        %v588 = vld [vmem:[%s585 + $0x8] sm:$0xf]
        %v589 = vld [vmem:[%s585 + $0xc] sm:$0xf]
        %v594 = vunpack.c.l.b16 %v586
        %v595 = vunpack.c.l.b16 %v587
        %v596 = vunpack.c.l.b16 %v588
        %v597 = vunpack.c.l.b16 %v589
        %v598 = vpack.c.b16 %v595, %v594
        %v599 = vpack.c.b16 %v597, %v596
        %602 = vmatprep.subr.bf16.mxu0 0
        %603 = vmatpush1.bf16.msra.mxu0 %v598
        %604 = vmatprep.subr.bf16.mxu0 0
        %605 = vmatpush1.bf16.msra.mxu0 %v599
        %606 = vmatprep.subr.bf16.mxu0 0
        %607 = vmatpush1.bf16.msra.mxu0 0
        %608 = vmatprep.subr.bf16.mxu0 0
        %609 = vmatpush1.bf16.msra.mxu0 0
        %610 = vmatprep.subr.bf16.mxu0 0
        %611 = vmatpush1.bf16.msra.mxu0 0
        %612 = vmatprep.subr.bf16.mxu0 0
        %613 = vmatpush1.bf16.msra.mxu0 0
        %614 = vmatprep.subr.bf16.mxu0 0
        %615 = vmatpush1.bf16.msra.mxu0 0
        %616 = vmatprep.subr.bf16.mxu0 0
        %617 = vmatpush1.bf16.msra.mxu0 0
        %618 = vmatprep.subr.bf16.mxu0 0
        %619 = vmatpush1.bf16.msra.mxu0 0
        %620 = vmatprep.subr.bf16.mxu0 0
        %621 = vmatpush1.bf16.msra.mxu0 0
        %622 = vmatprep.subr.bf16.mxu0 0
        %623 = vmatpush1.bf16.msra.mxu0 0
        %624 = vmatprep.subr.bf16.mxu0 0
        %625 = vmatpush1.bf16.msra.mxu0 0
        %626 = vmatprep.subr.bf16.mxu0 0
        %627 = vmatpush1.bf16.msra.mxu0 0
        %628 = vmatprep.subr.bf16.mxu0 0
        %629 = vmatpush1.bf16.msra.mxu0 0
        %630 = vmatprep.subr.bf16.mxu0 0
        %631 = vmatpush1.bf16.msra.mxu0 0
        %632 = vmatprep.subr.bf16.mxu0 0
        %633 = vmatpush1.bf16.msra.mxu0 0
        %634 = vmatprep.mubr.bf16.mxu0 0
        %635 = vmatmul.mubr.bf16.gmra.mrb[0].mxu0 %v318
        %v636 = vpop.f32.mrb[0].mxu0
        %v637 = vadd.f32 0.0, %v636
        %v638 = vpop.f32.mrb[0].mxu0
        %v639 = vpop.f32.mrb[0].mxu0
        %v640 = vpop.f32.mrb[0].mxu0
        %641 = vdwg.mxu0
        %s642 = scalar_lea.vmem %s3, 16
        %v643 = vld [vmem:[%s642] sm:$0xf]
        %v644 = vld [vmem:[%s642 + $0x4] sm:$0xf]
        %v645 = vld [vmem:[%s642 + $0x8] sm:$0xf]
        %v646 = vld [vmem:[%s642 + $0xc] sm:$0xf]
        %v651 = vunpack.c.l.b16 %v643
        %v652 = vunpack.c.l.b16 %v644
        %v653 = vunpack.c.l.b16 %v645
        %v654 = vunpack.c.l.b16 %v646
        %v655 = vpack.c.b16 %v652, %v651
        %v656 = vpack.c.b16 %v654, %v653
        %659 = vmatprep.subr.bf16.mxu0 0
        %660 = vmatpush1.bf16.msra.mxu0 %v655
        %661 = vmatprep.subr.bf16.mxu0 0
        %662 = vmatpush1.bf16.msra.mxu0 %v656
        %663 = vmatprep.subr.bf16.mxu0 0
        %664 = vmatpush1.bf16.msra.mxu0 0
        %665 = vmatprep.subr.bf16.mxu0 0
        %666 = vmatpush1.bf16.msra.mxu0 0
        %667 = vmatprep.subr.bf16.mxu0 0
        %668 = vmatpush1.bf16.msra.mxu0 0
        %669 = vmatprep.subr.bf16.mxu0 0
        %670 = vmatpush1.bf16.msra.mxu0 0
        %671 = vmatprep.subr.bf16.mxu0 0
        %672 = vmatpush1.bf16.msra.mxu0 0
        %673 = vmatprep.subr.bf16.mxu0 0
        %674 = vmatpush1.bf16.msra.mxu0 0
        %675 = vmatprep.subr.bf16.mxu0 0
        %676 = vmatpush1.bf16.msra.mxu0 0
        %677 = vmatprep.subr.bf16.mxu0 0
        %678 = vmatpush1.bf16.msra.mxu0 0
        %679 = vmatprep.subr.bf16.mxu0 0
        %680 = vmatpush1.bf16.msra.mxu0 0
        %681 = vmatprep.subr.bf16.mxu0 0
        %682 = vmatpush1.bf16.msra.mxu0 0
        %683 = vmatprep.subr.bf16.mxu0 0
        %684 = vmatpush1.bf16.msra.mxu0 0
        %685 = vmatprep.subr.bf16.mxu0 0
        %686 = vmatpush1.bf16.msra.mxu0 0
        %687 = vmatprep.subr.bf16.mxu0 0
        %688 = vmatpush1.bf16.msra.mxu0 0
        %689 = vmatprep.subr.bf16.mxu0 0
        %690 = vmatpush1.bf16.msra.mxu0 0
        %691 = vmatprep.mubr.bf16.mxu0 0
        %692 = vmatmul.mubr.bf16.gmra.mrb[0].mxu0 %v377
        %v693 = vpop.f32.mrb[0].mxu0
        %v694 = vadd.f32 0.0, %v693
        %v695 = vpop.f32.mrb[0].mxu0
        %v696 = vpop.f32.mrb[0].mxu0
        %v697 = vadd.f32 0.0, %v696
        %v698 = vpop.f32.mrb[0].mxu0
        %699 = vdwg.mxu0
        %s700 = scalar_lea.vmem %s4, 16
        %v701 = vld [vmem:[%s700] sm:$0xf]
        %v702 = vld [vmem:[%s700 + $0x4] sm:$0xf]
        %v703 = vld [vmem:[%s700 + $0x8] sm:$0xf]
        %v704 = vld [vmem:[%s700 + $0xc] sm:$0xf]
        %v709 = vunpack.c.l.b16 %v701
        %v710 = vunpack.c.l.b16 %v702
        %v711 = vunpack.c.l.b16 %v703
        %v712 = vunpack.c.l.b16 %v704
        %v713 = vpack.c.b16 %v710, %v709
        %v714 = vpack.c.b16 %v712, %v711
        %717 = vmatprep.subr.bf16.mxu0 0
        %718 = vmatpush1.bf16.msra.mxu0 %v713
        %719 = vmatprep.subr.bf16.mxu0 0
        %720 = vmatpush1.bf16.msra.mxu0 %v714
        %721 = vmatprep.subr.bf16.mxu0 0
        %722 = vmatpush1.bf16.msra.mxu0 0
        %723 = vmatprep.subr.bf16.mxu0 0
        %724 = vmatpush1.bf16.msra.mxu0 0
        %725 = vmatprep.subr.bf16.mxu0 0
        %726 = vmatpush1.bf16.msra.mxu0 0
        %727 = vmatprep.subr.bf16.mxu0 0
        %728 = vmatpush1.bf16.msra.mxu0 0
        %729 = vmatprep.subr.bf16.mxu0 0
        %730 = vmatpush1.bf16.msra.mxu0 0
        %731 = vmatprep.subr.bf16.mxu0 0
        %732 = vmatpush1.bf16.msra.mxu0 0
        %733 = vmatprep.subr.bf16.mxu0 0
        %734 = vmatpush1.bf16.msra.mxu0 0
        %735 = vmatprep.subr.bf16.mxu0 0
        %736 = vmatpush1.bf16.msra.mxu0 0
        %737 = vmatprep.subr.bf16.mxu0 0
        %738 = vmatpush1.bf16.msra.mxu0 0
        %739 = vmatprep.subr.bf16.mxu0 0
        %740 = vmatpush1.bf16.msra.mxu0 0
        %741 = vmatprep.subr.bf16.mxu0 0
        %742 = vmatpush1.bf16.msra.mxu0 0
        %743 = vmatprep.subr.bf16.mxu0 0
        %744 = vmatpush1.bf16.msra.mxu0 0
        %745 = vmatprep.subr.bf16.mxu0 0
        %746 = vmatpush1.bf16.msra.mxu0 0
        %747 = vmatprep.subr.bf16.mxu0 0
        %748 = vmatpush1.bf16.msra.mxu0 0
        %749 = vmatprep.mubr.bf16.mxu0 0
        %750 = vmatmul.mubr.bf16.gmra.mrb[0].mxu0 %v377
        %v751 = vpop.f32.mrb[0].mxu0
        %v752 = vadd.f32 0.0, %v751
        %v753 = vpop.f32.mrb[0].mxu0
        %v754 = vpop.f32.mrb[0].mxu0
        %v755 = vadd.f32 0.0, %v754
        %v756 = vpop.f32.mrb[0].mxu0
        %757 = vdwg.mxu0
        %v758 = vpack.c.bf16 %v637, %v637
        %v759 = vpack.c.bf16 %v697, %v694
        %v760 = vpack.c.bf16 %v755, %v752
        %v762 = vsel %vm480, %v758, 0
        %v765 = vsel %vm480, %v759, 0
        %767 = vmatprep.subr.bf16.mxu0 0
        %768 = vmatpush1.bf16.xpose.msra.mxu0 %v765
        %769 = vmatprep.subr.bf16.mxu0 0
        %770 = vmatpush1.bf16.xpose.msra.mxu0 0
        %771 = vmatprep.subr.bf16.mxu0 0
        %772 = vmatpush1.bf16.xpose.msra.mxu0 0
        %773 = vmatprep.subr.bf16.mxu0 0
        %774 = vmatpush1.bf16.xpose.msra.mxu0 0
        %775 = vmatprep.subr.bf16.mxu0 0
        %776 = vmatpush1.bf16.xpose.msra.mxu0 0
        %777 = vmatprep.subr.bf16.mxu0 0
        %778 = vmatpush1.bf16.xpose.msra.mxu0 0
        %779 = vmatprep.subr.bf16.mxu0 0
        %780 = vmatpush1.bf16.xpose.msra.mxu0 0
        %781 = vmatprep.subr.bf16.mxu0 0
        %782 = vmatpush1.bf16.xpose.msra.mxu0 0
        %783 = vmatprep.subr.bf16.mxu0 0
        %784 = vmatpush1.bf16.xpose.msra.mxu0 0
        %785 = vmatprep.subr.bf16.mxu0 0
        %786 = vmatpush1.bf16.xpose.msra.mxu0 0
        %787 = vmatprep.subr.bf16.mxu0 0
        %788 = vmatpush1.bf16.xpose.msra.mxu0 0
        %789 = vmatprep.subr.bf16.mxu0 0
        %790 = vmatpush1.bf16.xpose.msra.mxu0 0
        %791 = vmatprep.subr.bf16.mxu0 0
        %792 = vmatpush1.bf16.xpose.msra.mxu0 0
        %793 = vmatprep.subr.bf16.mxu0 0
        %794 = vmatpush1.bf16.xpose.msra.mxu0 0
        %795 = vmatprep.subr.bf16.mxu0 0
        %796 = vmatpush1.bf16.xpose.msra.mxu0 0
        %797 = vmatprep.subr.bf16.mxu0 0
        %798 = vmatpush1.bf16.xpose.msra.mxu0 0
        %799 = vmatprep.mubr.bf16.mxu0 0
        %800 = vmatmul.mubr.bf16.gmra.mrb[0].mxu0 %v762
        %v801 = vpop.f32.mrb[0].mxu0
        %v802 = vadd.f32 0.0, %v801
        %v803 = vpop.f32.mrb[0].mxu0
        %v804 = vpop.f32.mrb[0].mxu0
        %v805 = vpop.f32.mrb[0].mxu0
        %806 = vdwg.mxu0
        %v807 = vmul.f32 %v802, 0.35355338
        %v808 = vsel %vm528, %v807, -inf
        %809 = vmax.xlane.f32.xlu0 %v808
        %v810 = vpop.xlane.xlu0 %809
        %v811 = vsub.f32 %v807, %v810
        %v812 = vmul.f32 %v811, 1.442695
        %v813 = vpow.pop %v812
        %v814 = vsel %vm528, %v813, 0.0
        %815 = vadd.xlane.f32.xlu0 %v814
        %v816 = vpop.xlane.xlu0 %815
        %v817 = vrcp.pop %v816
        %v818 = vmul.f32 %v813, %v817
        %v819 = vpack.c.bf16 %v818, %v818
        %v821 = vsel %vm528, %v819, 0
        %823 = vmatprep.subr.bf16.mxu0 0
        %824 = vmatpush1.bf16.msra.mxu0 %v760
        %825 = vmatprep.subr.bf16.mxu0 0
        %826 = vmatpush1.bf16.msra.mxu0 0
        %827 = vmatprep.subr.bf16.mxu0 0
        %828 = vmatpush1.bf16.msra.mxu0 0
        %829 = vmatprep.subr.bf16.mxu0 0
        %830 = vmatpush1.bf16.msra.mxu0 0
        %831 = vmatprep.subr.bf16.mxu0 0
        %832 = vmatpush1.bf16.msra.mxu0 0
        %833 = vmatprep.subr.bf16.mxu0 0
        %834 = vmatpush1.bf16.msra.mxu0 0
        %835 = vmatprep.subr.bf16.mxu0 0
        %836 = vmatpush1.bf16.msra.mxu0 0
        %837 = vmatprep.subr.bf16.mxu0 0
        %838 = vmatpush1.bf16.msra.mxu0 0
        %839 = vmatprep.subr.bf16.mxu0 0
        %840 = vmatpush1.bf16.msra.mxu0 0
        %841 = vmatprep.subr.bf16.mxu0 0
        %842 = vmatpush1.bf16.msra.mxu0 0
        %843 = vmatprep.subr.bf16.mxu0 0
        %844 = vmatpush1.bf16.msra.mxu0 0
        %845 = vmatprep.subr.bf16.mxu0 0
        %846 = vmatpush1.bf16.msra.mxu0 0
        %847 = vmatprep.subr.bf16.mxu0 0
        %848 = vmatpush1.bf16.msra.mxu0 0
        %849 = vmatprep.subr.bf16.mxu0 0
        %850 = vmatpush1.bf16.msra.mxu0 0
        %851 = vmatprep.subr.bf16.mxu0 0
        %852 = vmatpush1.bf16.msra.mxu0 0
        %853 = vmatprep.subr.bf16.mxu0 0
        %854 = vmatpush1.bf16.msra.mxu0 0
        %855 = vmatprep.mubr.bf16.mxu0 0
        %856 = vmatmul.mubr.bf16.gmra.mrb[0].mxu0 %v821
        %v857 = vpop.f32.mrb[0].mxu0
        %v858 = vadd.f32 0.0, %v857
        %v859 = vpop.f32.mrb[0].mxu0
        %v860 = vpop.f32.mrb[0].mxu0
        %v861 = vpop.f32.mrb[0].mxu0
        %862 = vdwg.mxu0
        %864 = vrot.lane.b32.xlu0 %v858, 8
        %v865 = vpop.permute.xlu0 %864
        %vm867 = vcmask 130112
        %868 = vst.msk [vmem:[#allocation2] sm:$0xff] %vm867, %v865
        %s869 = scalar_lea.vmem %s2, 32
        %v870 = vld [vmem:[%s869] sm:$0xf]
        %v871 = vld [vmem:[%s869 + $0x4] sm:$0xf]
        %v872 = vld [vmem:[%s869 + $0x8] sm:$0xf]
        %v873 = vld [vmem:[%s869 + $0xc] sm:$0xf]
        %v878 = vunpack.c.l.b16 %v870
        %v879 = vunpack.c.l.b16 %v871
        %v880 = vunpack.c.l.b16 %v872
        %v881 = vunpack.c.l.b16 %v873
        %v882 = vpack.c.b16 %v879, %v878
        %v883 = vpack.c.b16 %v881, %v880
        %886 = vmatprep.subr.bf16.mxu0 0
        %887 = vmatpush1.bf16.msra.mxu0 %v882
        %888 = vmatprep.subr.bf16.mxu0 0
        %889 = vmatpush1.bf16.msra.mxu0 %v883
        %890 = vmatprep.subr.bf16.mxu0 0
        %891 = vmatpush1.bf16.msra.mxu0 0
        %892 = vmatprep.subr.bf16.mxu0 0
        %893 = vmatpush1.bf16.msra.mxu0 0
        %894 = vmatprep.subr.bf16.mxu0 0
        %895 = vmatpush1.bf16.msra.mxu0 0
        %896 = vmatprep.subr.bf16.mxu0 0
        %897 = vmatpush1.bf16.msra.mxu0 0
        %898 = vmatprep.subr.bf16.mxu0 0
        %899 = vmatpush1.bf16.msra.mxu0 0
        %900 = vmatprep.subr.bf16.mxu0 0
        %901 = vmatpush1.bf16.msra.mxu0 0
        %902 = vmatprep.subr.bf16.mxu0 0
        %903 = vmatpush1.bf16.msra.mxu0 0
        %904 = vmatprep.subr.bf16.mxu0 0
        %905 = vmatpush1.bf16.msra.mxu0 0
        %906 = vmatprep.subr.bf16.mxu0 0
        %907 = vmatpush1.bf16.msra.mxu0 0
        %908 = vmatprep.subr.bf16.mxu0 0
        %909 = vmatpush1.bf16.msra.mxu0 0
        %910 = vmatprep.subr.bf16.mxu0 0
        %911 = vmatpush1.bf16.msra.mxu0 0
        %912 = vmatprep.subr.bf16.mxu0 0
        %913 = vmatpush1.bf16.msra.mxu0 0
        %914 = vmatprep.subr.bf16.mxu0 0
        %915 = vmatpush1.bf16.msra.mxu0 0
        %916 = vmatprep.subr.bf16.mxu0 0
        %917 = vmatpush1.bf16.msra.mxu0 0
        %918 = vmatprep.mubr.bf16.mxu0 0
        %919 = vmatmul.mubr.bf16.gmra.mrb[0].mxu0 %v318
        %v920 = vpop.f32.mrb[0].mxu0
        %v921 = vadd.f32 0.0, %v920
        %v922 = vpop.f32.mrb[0].mxu0
        %v923 = vpop.f32.mrb[0].mxu0
        %v924 = vpop.f32.mrb[0].mxu0
        %925 = vdwg.mxu0
        %s926 = scalar_lea.vmem %s3, 32
        %v927 = vld [vmem:[%s926] sm:$0xf]
        %v928 = vld [vmem:[%s926 + $0x4] sm:$0xf]
        %v929 = vld [vmem:[%s926 + $0x8] sm:$0xf]
        %v930 = vld [vmem:[%s926 + $0xc] sm:$0xf]
        %v935 = vunpack.c.l.b16 %v927
        %v936 = vunpack.c.l.b16 %v928
        %v937 = vunpack.c.l.b16 %v929
        %v938 = vunpack.c.l.b16 %v930
        %v939 = vpack.c.b16 %v936, %v935
        %v940 = vpack.c.b16 %v938, %v937
        %943 = vmatprep.subr.bf16.mxu0 0
        %944 = vmatpush1.bf16.msra.mxu0 %v939
        %945 = vmatprep.subr.bf16.mxu0 0
        %946 = vmatpush1.bf16.msra.mxu0 %v940
        %947 = vmatprep.subr.bf16.mxu0 0
        %948 = vmatpush1.bf16.msra.mxu0 0
        %949 = vmatprep.subr.bf16.mxu0 0
        %950 = vmatpush1.bf16.msra.mxu0 0
        %951 = vmatprep.subr.bf16.mxu0 0
        %952 = vmatpush1.bf16.msra.mxu0 0
        %953 = vmatprep.subr.bf16.mxu0 0
        %954 = vmatpush1.bf16.msra.mxu0 0
        %955 = vmatprep.subr.bf16.mxu0 0
        %956 = vmatpush1.bf16.msra.mxu0 0
        %957 = vmatprep.subr.bf16.mxu0 0
        %958 = vmatpush1.bf16.msra.mxu0 0
        %959 = vmatprep.subr.bf16.mxu0 0
        %960 = vmatpush1.bf16.msra.mxu0 0
        %961 = vmatprep.subr.bf16.mxu0 0
        %962 = vmatpush1.bf16.msra.mxu0 0
        %963 = vmatprep.subr.bf16.mxu0 0
        %964 = vmatpush1.bf16.msra.mxu0 0
        %965 = vmatprep.subr.bf16.mxu0 0
        %966 = vmatpush1.bf16.msra.mxu0 0
        %967 = vmatprep.subr.bf16.mxu0 0
        %968 = vmatpush1.bf16.msra.mxu0 0
        %969 = vmatprep.subr.bf16.mxu0 0
        %970 = vmatpush1.bf16.msra.mxu0 0
        %971 = vmatprep.subr.bf16.mxu0 0
        %972 = vmatpush1.bf16.msra.mxu0 0
        %973 = vmatprep.subr.bf16.mxu0 0
        %974 = vmatpush1.bf16.msra.mxu0 0
        %975 = vmatprep.mubr.bf16.mxu0 0
        %976 = vmatmul.mubr.bf16.gmra.mrb[0].mxu0 %v377
        %v977 = vpop.f32.mrb[0].mxu0
        %v978 = vadd.f32 0.0, %v977
        %v979 = vpop.f32.mrb[0].mxu0
        %v980 = vpop.f32.mrb[0].mxu0
        %v981 = vadd.f32 0.0, %v980
        %v982 = vpop.f32.mrb[0].mxu0
        %983 = vdwg.mxu0
        %s984 = scalar_lea.vmem %s4, 32
        %v985 = vld [vmem:[%s984] sm:$0xf]
        %v986 = vld [vmem:[%s984 + $0x4] sm:$0xf]
        %v987 = vld [vmem:[%s984 + $0x8] sm:$0xf]
        %v988 = vld [vmem:[%s984 + $0xc] sm:$0xf]
        %v993 = vunpack.c.l.b16 %v985
        %v994 = vunpack.c.l.b16 %v986
        %v995 = vunpack.c.l.b16 %v987
        %v996 = vunpack.c.l.b16 %v988
        %v997 = vpack.c.b16 %v994, %v993
        %v998 = vpack.c.b16 %v996, %v995
        %1001 = vmatprep.subr.bf16.mxu0 0
        %1002 = vmatpush1.bf16.msra.mxu0 %v997
        %1003 = vmatprep.subr.bf16.mxu0 0
        %1004 = vmatpush1.bf16.msra.mxu0 %v998
        %1005 = vmatprep.subr.bf16.mxu0 0
        %1006 = vmatpush1.bf16.msra.mxu0 0
        %1007 = vmatprep.subr.bf16.mxu0 0
        %1008 = vmatpush1.bf16.msra.mxu0 0
        %1009 = vmatprep.subr.bf16.mxu0 0
        %1010 = vmatpush1.bf16.msra.mxu0 0
        %1011 = vmatprep.subr.bf16.mxu0 0
        %1012 = vmatpush1.bf16.msra.mxu0 0
        %1013 = vmatprep.subr.bf16.mxu0 0
        %1014 = vmatpush1.bf16.msra.mxu0 0
        %1015 = vmatprep.subr.bf16.mxu0 0
        %1016 = vmatpush1.bf16.msra.mxu0 0
        %1017 = vmatprep.subr.bf16.mxu0 0
        %1018 = vmatpush1.bf16.msra.mxu0 0
        %1019 = vmatprep.subr.bf16.mxu0 0
        %1020 = vmatpush1.bf16.msra.mxu0 0
        %1021 = vmatprep.subr.bf16.mxu0 0
        %1022 = vmatpush1.bf16.msra.mxu0 0
        %1023 = vmatprep.subr.bf16.mxu0 0
        %1024 = vmatpush1.bf16.msra.mxu0 0
        %1025 = vmatprep.subr.bf16.mxu0 0
        %1026 = vmatpush1.bf16.msra.mxu0 0
        %1027 = vmatprep.subr.bf16.mxu0 0
        %1028 = vmatpush1.bf16.msra.mxu0 0
        %1029 = vmatprep.subr.bf16.mxu0 0
        %1030 = vmatpush1.bf16.msra.mxu0 0
        %1031 = vmatprep.subr.bf16.mxu0 0
        %1032 = vmatpush1.bf16.msra.mxu0 0
        %1033 = vmatprep.mubr.bf16.mxu0 0
        %1034 = vmatmul.mubr.bf16.gmra.mrb[0].mxu0 %v377
        %v1035 = vpop.f32.mrb[0].mxu0
        %v1036 = vadd.f32 0.0, %v1035
        %v1037 = vpop.f32.mrb[0].mxu0
        %v1038 = vpop.f32.mrb[0].mxu0
        %v1039 = vadd.f32 0.0, %v1038
        %v1040 = vpop.f32.mrb[0].mxu0
        %1041 = vdwg.mxu0
        %v1042 = vpack.c.bf16 %v921, %v921
        %v1043 = vpack.c.bf16 %v981, %v978
        %v1044 = vpack.c.bf16 %v1039, %v1036
        %v1046 = vsel %vm480, %v1042, 0
        %v1049 = vsel %vm480, %v1043, 0
        %1051 = vmatprep.subr.bf16.mxu0 0
        %1052 = vmatpush1.bf16.xpose.msra.mxu0 %v1049
        %1053 = vmatprep.subr.bf16.mxu0 0
        %1054 = vmatpush1.bf16.xpose.msra.mxu0 0
        %1055 = vmatprep.subr.bf16.mxu0 0
        %1056 = vmatpush1.bf16.xpose.msra.mxu0 0
        %1057 = vmatprep.subr.bf16.mxu0 0
        %1058 = vmatpush1.bf16.xpose.msra.mxu0 0
        %1059 = vmatprep.subr.bf16.mxu0 0
        %1060 = vmatpush1.bf16.xpose.msra.mxu0 0
        %1061 = vmatprep.subr.bf16.mxu0 0
        %1062 = vmatpush1.bf16.xpose.msra.mxu0 0
        %1063 = vmatprep.subr.bf16.mxu0 0
        %1064 = vmatpush1.bf16.xpose.msra.mxu0 0
        %1065 = vmatprep.subr.bf16.mxu0 0
        %1066 = vmatpush1.bf16.xpose.msra.mxu0 0
        %1067 = vmatprep.subr.bf16.mxu0 0
        %1068 = vmatpush1.bf16.xpose.msra.mxu0 0
        %1069 = vmatprep.subr.bf16.mxu0 0
        %1070 = vmatpush1.bf16.xpose.msra.mxu0 0
        %1071 = vmatprep.subr.bf16.mxu0 0
        %1072 = vmatpush1.bf16.xpose.msra.mxu0 0
        %1073 = vmatprep.subr.bf16.mxu0 0
        %1074 = vmatpush1.bf16.xpose.msra.mxu0 0
        %1075 = vmatprep.subr.bf16.mxu0 0
        %1076 = vmatpush1.bf16.xpose.msra.mxu0 0
        %1077 = vmatprep.subr.bf16.mxu0 0
        %1078 = vmatpush1.bf16.xpose.msra.mxu0 0
        %1079 = vmatprep.subr.bf16.mxu0 0
        %1080 = vmatpush1.bf16.xpose.msra.mxu0 0
        %1081 = vmatprep.subr.bf16.mxu0 0
        %1082 = vmatpush1.bf16.xpose.msra.mxu0 0
        %1083 = vmatprep.mubr.bf16.mxu0 0
        %1084 = vmatmul.mubr.bf16.gmra.mrb[0].mxu0 %v1046
        %v1085 = vpop.f32.mrb[0].mxu0
        %v1086 = vadd.f32 0.0, %v1085
        %v1087 = vpop.f32.mrb[0].mxu0
        %v1088 = vpop.f32.mrb[0].mxu0
        %v1089 = vpop.f32.mrb[0].mxu0
        %1090 = vdwg.mxu0
        %v1091 = vmul.f32 %v1086, 0.35355338
        %v1092 = vsel %vm528, %v1091, -inf
        %1093 = vmax.xlane.f32.xlu0 %v1092
        %v1094 = vpop.xlane.xlu0 %1093
        %v1095 = vsub.f32 %v1091, %v1094
        %v1096 = vmul.f32 %v1095, 1.442695
        %v1097 = vpow.pop %v1096
        %v1098 = vsel %vm528, %v1097, 0.0
        %1099 = vadd.xlane.f32.xlu0 %v1098
        %v1100 = vpop.xlane.xlu0 %1099
        %v1101 = vrcp.pop %v1100
        %v1102 = vmul.f32 %v1097, %v1101
        %v1103 = vpack.c.bf16 %v1102, %v1102
        %v1105 = vsel %vm528, %v1103, 0
        %1107 = vmatprep.subr.bf16.mxu0 0
        %1108 = vmatpush1.bf16.msra.mxu0 %v1044
        %1109 = vmatprep.subr.bf16.mxu0 0
        %1110 = vmatpush1.bf16.msra.mxu0 0
        %1111 = vmatprep.subr.bf16.mxu0 0
        %1112 = vmatpush1.bf16.msra.mxu0 0
        %1113 = vmatprep.subr.bf16.mxu0 0
        %1114 = vmatpush1.bf16.msra.mxu0 0
        %1115 = vmatprep.subr.bf16.mxu0 0
        %1116 = vmatpush1.bf16.msra.mxu0 0
        %1117 = vmatprep.subr.bf16.mxu0 0
        %1118 = vmatpush1.bf16.msra.mxu0 0
        %1119 = vmatprep.subr.bf16.mxu0 0
        %1120 = vmatpush1.bf16.msra.mxu0 0
        %1121 = vmatprep.subr.bf16.mxu0 0
        %1122 = vmatpush1.bf16.msra.mxu0 0
        %1123 = vmatprep.subr.bf16.mxu0 0
        %1124 = vmatpush1.bf16.msra.mxu0 0
        %1125 = vmatprep.subr.bf16.mxu0 0
        %1126 = vmatpush1.bf16.msra.mxu0 0
        %1127 = vmatprep.subr.bf16.mxu0 0
        %1128 = vmatpush1.bf16.msra.mxu0 0
        %1129 = vmatprep.subr.bf16.mxu0 0
        %1130 = vmatpush1.bf16.msra.mxu0 0
        %1131 = vmatprep.subr.bf16.mxu0 0
        %1132 = vmatpush1.bf16.msra.mxu0 0
        %1133 = vmatprep.subr.bf16.mxu0 0
        %1134 = vmatpush1.bf16.msra.mxu0 0
        %1135 = vmatprep.subr.bf16.mxu0 0
        %1136 = vmatpush1.bf16.msra.mxu0 0
        %1137 = vmatprep.subr.bf16.mxu0 0
        %1138 = vmatpush1.bf16.msra.mxu0 0
        %1139 = vmatprep.mubr.bf16.mxu0 0
        %1140 = vmatmul.mubr.bf16.gmra.mrb[0].mxu0 %v1105
        %v1141 = vpop.f32.mrb[0].mxu0
        %v1142 = vadd.f32 0.0, %v1141
        %v1143 = vpop.f32.mrb[0].mxu0
        %v1144 = vpop.f32.mrb[0].mxu0
        %v1145 = vpop.f32.mrb[0].mxu0
        %1146 = vdwg.mxu0
        %1148 = vrot.lane.b32.xlu0 %v1142, 16
        %v1149 = vpop.permute.xlu0 %1148
        %vm1151 = vcmask 195712
        %1152 = vst.msk [vmem:[#allocation2] sm:$0xff] %vm1151, %v1149
        %s1153 = scalar_lea.vmem %s2, 48
        %v1154 = vld [vmem:[%s1153] sm:$0xf]
        %v1155 = vld [vmem:[%s1153 + $0x4] sm:$0xf]
        %v1156 = vld [vmem:[%s1153 + $0x8] sm:$0xf]
        %v1157 = vld [vmem:[%s1153 + $0xc] sm:$0xf]
        %v1162 = vunpack.c.l.b16 %v1154
        %v1163 = vunpack.c.l.b16 %v1155
        %v1164 = vunpack.c.l.b16 %v1156
        %v1165 = vunpack.c.l.b16 %v1157
        %v1166 = vpack.c.b16 %v1163, %v1162
        %v1167 = vpack.c.b16 %v1165, %v1164
        %1170 = vmatprep.subr.bf16.mxu0 0
        %1171 = vmatpush1.bf16.msra.mxu0 %v1166
        %1172 = vmatprep.subr.bf16.mxu0 0
        %1173 = vmatpush1.bf16.msra.mxu0 %v1167
        %1174 = vmatprep.subr.bf16.mxu0 0
        %1175 = vmatpush1.bf16.msra.mxu0 0
        %1176 = vmatprep.subr.bf16.mxu0 0
        %1177 = vmatpush1.bf16.msra.mxu0 0
        %1178 = vmatprep.subr.bf16.mxu0 0
        %1179 = vmatpush1.bf16.msra.mxu0 0
        %1180 = vmatprep.subr.bf16.mxu0 0
        %1181 = vmatpush1.bf16.msra.mxu0 0
        %1182 = vmatprep.subr.bf16.mxu0 0
        %1183 = vmatpush1.bf16.msra.mxu0 0
        %1184 = vmatprep.subr.bf16.mxu0 0
        %1185 = vmatpush1.bf16.msra.mxu0 0
        %1186 = vmatprep.subr.bf16.mxu0 0
        %1187 = vmatpush1.bf16.msra.mxu0 0
        %1188 = vmatprep.subr.bf16.mxu0 0
        %1189 = vmatpush1.bf16.msra.mxu0 0
        %1190 = vmatprep.subr.bf16.mxu0 0
        %1191 = vmatpush1.bf16.msra.mxu0 0
        %1192 = vmatprep.subr.bf16.mxu0 0
        %1193 = vmatpush1.bf16.msra.mxu0 0
        %1194 = vmatprep.subr.bf16.mxu0 0
        %1195 = vmatpush1.bf16.msra.mxu0 0
        %1196 = vmatprep.subr.bf16.mxu0 0
        %1197 = vmatpush1.bf16.msra.mxu0 0
        %1198 = vmatprep.subr.bf16.mxu0 0
        %1199 = vmatpush1.bf16.msra.mxu0 0
        %1200 = vmatprep.subr.bf16.mxu0 0
        %1201 = vmatpush1.bf16.msra.mxu0 0
        %1202 = vmatprep.mubr.bf16.mxu0 0
        %1203 = vmatmul.mubr.bf16.gmra.mrb[0].mxu0 %v318
        %v1204 = vpop.f32.mrb[0].mxu0
        %v1205 = vadd.f32 0.0, %v1204
        %v1206 = vpop.f32.mrb[0].mxu0
        %v1207 = vpop.f32.mrb[0].mxu0
        %v1208 = vpop.f32.mrb[0].mxu0
        %1209 = vdwg.mxu0
        %s1210 = scalar_lea.vmem %s3, 48
        %v1211 = vld [vmem:[%s1210] sm:$0xf]
        %v1212 = vld [vmem:[%s1210 + $0x4] sm:$0xf]
        %v1213 = vld [vmem:[%s1210 + $0x8] sm:$0xf]
        %v1214 = vld [vmem:[%s1210 + $0xc] sm:$0xf]
        %v1219 = vunpack.c.l.b16 %v1211
        %v1220 = vunpack.c.l.b16 %v1212
        %v1221 = vunpack.c.l.b16 %v1213
        %v1222 = vunpack.c.l.b16 %v1214
        %v1223 = vpack.c.b16 %v1220, %v1219
        %v1224 = vpack.c.b16 %v1222, %v1221
        %1227 = vmatprep.subr.bf16.mxu0 0
        %1228 = vmatpush1.bf16.msra.mxu0 %v1223
        %1229 = vmatprep.subr.bf16.mxu0 0
        %1230 = vmatpush1.bf16.msra.mxu0 %v1224
        %1231 = vmatprep.subr.bf16.mxu0 0
        %1232 = vmatpush1.bf16.msra.mxu0 0
        %1233 = vmatprep.subr.bf16.mxu0 0
        %1234 = vmatpush1.bf16.msra.mxu0 0
        %1235 = vmatprep.subr.bf16.mxu0 0
        %1236 = vmatpush1.bf16.msra.mxu0 0
        %1237 = vmatprep.subr.bf16.mxu0 0
        %1238 = vmatpush1.bf16.msra.mxu0 0
        %1239 = vmatprep.subr.bf16.mxu0 0
        %1240 = vmatpush1.bf16.msra.mxu0 0
        %1241 = vmatprep.subr.bf16.mxu0 0
        %1242 = vmatpush1.bf16.msra.mxu0 0
        %1243 = vmatprep.subr.bf16.mxu0 0
        %1244 = vmatpush1.bf16.msra.mxu0 0
        %1245 = vmatprep.subr.bf16.mxu0 0
        %1246 = vmatpush1.bf16.msra.mxu0 0
        %1247 = vmatprep.subr.bf16.mxu0 0
        %1248 = vmatpush1.bf16.msra.mxu0 0
        %1249 = vmatprep.subr.bf16.mxu0 0
        %1250 = vmatpush1.bf16.msra.mxu0 0
        %1251 = vmatprep.subr.bf16.mxu0 0
        %1252 = vmatpush1.bf16.msra.mxu0 0
        %1253 = vmatprep.subr.bf16.mxu0 0
        %1254 = vmatpush1.bf16.msra.mxu0 0
        %1255 = vmatprep.subr.bf16.mxu0 0
        %1256 = vmatpush1.bf16.msra.mxu0 0
        %1257 = vmatprep.subr.bf16.mxu0 0
        %1258 = vmatpush1.bf16.msra.mxu0 0
        %1259 = vmatprep.mubr.bf16.mxu0 0
        %1260 = vmatmul.mubr.bf16.gmra.mrb[0].mxu0 %v377
        %v1261 = vpop.f32.mrb[0].mxu0
        %v1262 = vadd.f32 0.0, %v1261
        %v1263 = vpop.f32.mrb[0].mxu0
        %v1264 = vpop.f32.mrb[0].mxu0
        %v1265 = vadd.f32 0.0, %v1264
        %v1266 = vpop.f32.mrb[0].mxu0
        %1267 = vdwg.mxu0
        %s1268 = scalar_lea.vmem %s4, 48
        %v1269 = vld [vmem:[%s1268] sm:$0xf]
        %v1270 = vld [vmem:[%s1268 + $0x4] sm:$0xf]
        %v1271 = vld [vmem:[%s1268 + $0x8] sm:$0xf]
        %v1272 = vld [vmem:[%s1268 + $0xc] sm:$0xf]
        %v1277 = vunpack.c.l.b16 %v1269
        %v1278 = vunpack.c.l.b16 %v1270
        %v1279 = vunpack.c.l.b16 %v1271
        %v1280 = vunpack.c.l.b16 %v1272
        %v1281 = vpack.c.b16 %v1278, %v1277
        %v1282 = vpack.c.b16 %v1280, %v1279
        %1285 = vmatprep.subr.bf16.mxu0 0
        %1286 = vmatpush1.bf16.msra.mxu0 %v1281
        %1287 = vmatprep.subr.bf16.mxu0 0
        %1288 = vmatpush1.bf16.msra.mxu0 %v1282
        %1289 = vmatprep.subr.bf16.mxu0 0
        %1290 = vmatpush1.bf16.msra.mxu0 0
        %1291 = vmatprep.subr.bf16.mxu0 0
        %1292 = vmatpush1.bf16.msra.mxu0 0
        %1293 = vmatprep.subr.bf16.mxu0 0
        %1294 = vmatpush1.bf16.msra.mxu0 0
        %1295 = vmatprep.subr.bf16.mxu0 0
        %1296 = vmatpush1.bf16.msra.mxu0 0
        %1297 = vmatprep.subr.bf16.mxu0 0
        %1298 = vmatpush1.bf16.msra.mxu0 0
        %1299 = vmatprep.subr.bf16.mxu0 0
        %1300 = vmatpush1.bf16.msra.mxu0 0
        %1301 = vmatprep.subr.bf16.mxu0 0
        %1302 = vmatpush1.bf16.msra.mxu0 0
        %1303 = vmatprep.subr.bf16.mxu0 0
        %1304 = vmatpush1.bf16.msra.mxu0 0
        %1305 = vmatprep.subr.bf16.mxu0 0
        %1306 = vmatpush1.bf16.msra.mxu0 0
        %1307 = vmatprep.subr.bf16.mxu0 0
        %1308 = vmatpush1.bf16.msra.mxu0 0
        %1309 = vmatprep.subr.bf16.mxu0 0
        %1310 = vmatpush1.bf16.msra.mxu0 0
        %1311 = vmatprep.subr.bf16.mxu0 0
        %1312 = vmatpush1.bf16.msra.mxu0 0
        %1313 = vmatprep.subr.bf16.mxu0 0
        %1314 = vmatpush1.bf16.msra.mxu0 0
        %1315 = vmatprep.subr.bf16.mxu0 0
        %1316 = vmatpush1.bf16.msra.mxu0 0
        %1317 = vmatprep.mubr.bf16.mxu0 0
        %1318 = vmatmul.mubr.bf16.gmra.mrb[0].mxu0 %v377
        %v1319 = vpop.f32.mrb[0].mxu0
        %v1320 = vadd.f32 0.0, %v1319
        %v1321 = vpop.f32.mrb[0].mxu0
        %v1322 = vpop.f32.mrb[0].mxu0
        %v1323 = vadd.f32 0.0, %v1322
        %v1324 = vpop.f32.mrb[0].mxu0
        %1325 = vdwg.mxu0
        %v1326 = vpack.c.bf16 %v1205, %v1205
        %v1327 = vpack.c.bf16 %v1265, %v1262
        %v1328 = vpack.c.bf16 %v1323, %v1320
        %v1330 = vsel %vm480, %v1326, 0
        %v1333 = vsel %vm480, %v1327, 0
        %1335 = vmatprep.subr.bf16.mxu0 0
        %1336 = vmatpush1.bf16.xpose.msra.mxu0 %v1333
        %1337 = vmatprep.subr.bf16.mxu0 0
        %1338 = vmatpush1.bf16.xpose.msra.mxu0 0
        %1339 = vmatprep.subr.bf16.mxu0 0
        %1340 = vmatpush1.bf16.xpose.msra.mxu0 0
        %1341 = vmatprep.subr.bf16.mxu0 0
        %1342 = vmatpush1.bf16.xpose.msra.mxu0 0
        %1343 = vmatprep.subr.bf16.mxu0 0
        %1344 = vmatpush1.bf16.xpose.msra.mxu0 0
        %1345 = vmatprep.subr.bf16.mxu0 0
        %1346 = vmatpush1.bf16.xpose.msra.mxu0 0
        %1347 = vmatprep.subr.bf16.mxu0 0
        %1348 = vmatpush1.bf16.xpose.msra.mxu0 0
        %1349 = vmatprep.subr.bf16.mxu0 0
        %1350 = vmatpush1.bf16.xpose.msra.mxu0 0
        %1351 = vmatprep.subr.bf16.mxu0 0
        %1352 = vmatpush1.bf16.xpose.msra.mxu0 0
        %1353 = vmatprep.subr.bf16.mxu0 0
        %1354 = vmatpush1.bf16.xpose.msra.mxu0 0
        %1355 = vmatprep.subr.bf16.mxu0 0
        %1356 = vmatpush1.bf16.xpose.msra.mxu0 0
        %1357 = vmatprep.subr.bf16.mxu0 0
        %1358 = vmatpush1.bf16.xpose.msra.mxu0 0
        %1359 = vmatprep.subr.bf16.mxu0 0
        %1360 = vmatpush1.bf16.xpose.msra.mxu0 0
        %1361 = vmatprep.subr.bf16.mxu0 0
        %1362 = vmatpush1.bf16.xpose.msra.mxu0 0
        %1363 = vmatprep.subr.bf16.mxu0 0
        %1364 = vmatpush1.bf16.xpose.msra.mxu0 0
        %1365 = vmatprep.subr.bf16.mxu0 0
        %1366 = vmatpush1.bf16.xpose.msra.mxu0 0
        %1367 = vmatprep.mubr.bf16.mxu0 0
        %1368 = vmatmul.mubr.bf16.gmra.mrb[0].mxu0 %v1330
        %v1369 = vpop.f32.mrb[0].mxu0
        %v1370 = vadd.f32 0.0, %v1369
        %v1371 = vpop.f32.mrb[0].mxu0
        %v1372 = vpop.f32.mrb[0].mxu0
        %v1373 = vpop.f32.mrb[0].mxu0
        %1374 = vdwg.mxu0
        %v1375 = vmul.f32 %v1370, 0.35355338
        %v1376 = vsel %vm528, %v1375, -inf
        %1377 = vmax.xlane.f32.xlu0 %v1376
        %v1378 = vpop.xlane.xlu0 %1377
        %v1379 = vsub.f32 %v1375, %v1378
        %v1380 = vmul.f32 %v1379, 1.442695
        %v1381 = vpow.pop %v1380
        %v1382 = vsel %vm528, %v1381, 0.0
        %1383 = vadd.xlane.f32.xlu0 %v1382
        %v1384 = vpop.xlane.xlu0 %1383
        %v1385 = vrcp.pop %v1384
        %v1386 = vmul.f32 %v1381, %v1385
        %v1387 = vpack.c.bf16 %v1386, %v1386
        %v1389 = vsel %vm528, %v1387, 0
        %1391 = vmatprep.subr.bf16.mxu0 0
        %1392 = vmatpush1.bf16.msra.mxu0 %v1328
        %1393 = vmatprep.subr.bf16.mxu0 0
        %1394 = vmatpush1.bf16.msra.mxu0 0
        %1395 = vmatprep.subr.bf16.mxu0 0
        %1396 = vmatpush1.bf16.msra.mxu0 0
        %1397 = vmatprep.subr.bf16.mxu0 0
        %1398 = vmatpush1.bf16.msra.mxu0 0
        %1399 = vmatprep.subr.bf16.mxu0 0
        %1400 = vmatpush1.bf16.msra.mxu0 0
        %1401 = vmatprep.subr.bf16.mxu0 0
        %1402 = vmatpush1.bf16.msra.mxu0 0
        %1403 = vmatprep.subr.bf16.mxu0 0
        %1404 = vmatpush1.bf16.msra.mxu0 0
        %1405 = vmatprep.subr.bf16.mxu0 0
        %1406 = vmatpush1.bf16.msra.mxu0 0
        %1407 = vmatprep.subr.bf16.mxu0 0
        %1408 = vmatpush1.bf16.msra.mxu0 0
        %1409 = vmatprep.subr.bf16.mxu0 0
        %1410 = vmatpush1.bf16.msra.mxu0 0
        %1411 = vmatprep.subr.bf16.mxu0 0
        %1412 = vmatpush1.bf16.msra.mxu0 0
        %1413 = vmatprep.subr.bf16.mxu0 0
        %1414 = vmatpush1.bf16.msra.mxu0 0
        %1415 = vmatprep.subr.bf16.mxu0 0
        %1416 = vmatpush1.bf16.msra.mxu0 0
        %1417 = vmatprep.subr.bf16.mxu0 0
        %1418 = vmatpush1.bf16.msra.mxu0 0
        %1419 = vmatprep.subr.bf16.mxu0 0
        %1420 = vmatpush1.bf16.msra.mxu0 0
        %1421 = vmatprep.subr.bf16.mxu0 0
        %1422 = vmatpush1.bf16.msra.mxu0 0
        %1423 = vmatprep.mubr.bf16.mxu0 0
        %1424 = vmatmul.mubr.bf16.gmra.mrb[0].mxu0 %v1389
        %v1425 = vpop.f32.mrb[0].mxu0
        %v1426 = vadd.f32 0.0, %v1425
        %v1427 = vpop.f32.mrb[0].mxu0
        %v1428 = vpop.f32.mrb[0].mxu0
        %v1429 = vpop.f32.mrb[0].mxu0
        %1430 = vdwg.mxu0
        %1432 = vrot.lane.b32.xlu0 %v1426, 24
        %v1433 = vpop.permute.xlu0 %1432
        %vm1435 = vcmask 261312
        %1436 = vst.msk [vmem:[#allocation2] sm:$0xff] %vm1435, %v1433
        %v1437 = vld [vmem:[#allocation2] sm:$0xff]
        %v1438 = vpack.c.bf16 %v1437, %v1437
        %v1439 = vld [vmem:[%s5] sm:$0xf]
        %v1440 = vld [vmem:[%s5 + $0x4] sm:$0xf]
        %v1441 = vld [vmem:[%s5 + $0x8] sm:$0xf]
        %v1442 = vld [vmem:[%s5 + $0xc] sm:$0xf]
        %v1443 = vld [vmem:[%s6] sm:$0x1]
        %v1445 = vlaneseq
        %v1446 = vshrl.u32 %v1445, 7
        %v1447 = vsub.s32 0, %v1446
        %v1448 = vrot.slane %v1443, %v1447
        %v1454 = vunpack.c.l.b16 %v1439
        %v1455 = vunpack.c.l.b16 %v1440
        %v1456 = vunpack.c.l.b16 %v1441
        %v1457 = vunpack.c.l.b16 %v1442
        %v1458 = vpack.c.b16 %v1455, %v1454
        %v1459 = vpack.c.b16 %v1457, %v1456
        %v1463 = vsel %vm316, %v1438, 0
        %1465 = vmatprep.subr.bf16.mxu0 0
        %1466 = vmatpush1.bf16.msra.mxu0 %v1458
        %1467 = vmatprep.subr.bf16.mxu0 0
        %1468 = vmatpush1.bf16.msra.mxu0 %v1459
        %1469 = vmatprep.subr.bf16.mxu0 0
        %1470 = vmatpush1.bf16.msra.mxu0 0
        %1471 = vmatprep.subr.bf16.mxu0 0
        %1472 = vmatpush1.bf16.msra.mxu0 0
        %1473 = vmatprep.subr.bf16.mxu0 0
        %1474 = vmatpush1.bf16.msra.mxu0 0
        %1475 = vmatprep.subr.bf16.mxu0 0
        %1476 = vmatpush1.bf16.msra.mxu0 0
        %1477 = vmatprep.subr.bf16.mxu0 0
        %1478 = vmatpush1.bf16.msra.mxu0 0
        %1479 = vmatprep.subr.bf16.mxu0 0
        %1480 = vmatpush1.bf16.msra.mxu0 0
        %1481 = vmatprep.subr.bf16.mxu0 0
        %1482 = vmatpush1.bf16.msra.mxu0 0
        %1483 = vmatprep.subr.bf16.mxu0 0
        %1484 = vmatpush1.bf16.msra.mxu0 0
        %1485 = vmatprep.subr.bf16.mxu0 0
        %1486 = vmatpush1.bf16.msra.mxu0 0
        %1487 = vmatprep.subr.bf16.mxu0 0
        %1488 = vmatpush1.bf16.msra.mxu0 0
        %1489 = vmatprep.subr.bf16.mxu0 0
        %1490 = vmatpush1.bf16.msra.mxu0 0
        %1491 = vmatprep.subr.bf16.mxu0 0
        %1492 = vmatpush1.bf16.msra.mxu0 0
        %1493 = vmatprep.subr.bf16.mxu0 0
        %1494 = vmatpush1.bf16.msra.mxu0 0
        %1495 = vmatprep.subr.bf16.mxu0 0
        %1496 = vmatpush1.bf16.msra.mxu0 0
        %1497 = vmatprep.mubr.bf16.mxu0 0
        %1498 = vmatmul.mubr.bf16.gmra.mrb[0].mxu0 %v1463
        %v1499 = vpop.f32.mrb[0].mxu0
        %v1500 = vadd.f32 %v1448, %v1499
        %v1501 = vpop.f32.mrb[0].mxu0
        %v1502 = vpop.f32.mrb[0].mxu0
        %v1503 = vpop.f32.mrb[0].mxu0
        %1504 = vdwg.mxu0
        %1505 = vst.msk [vmem:[%s284] sm:$0xff] %vm316, %v1500
        %s1506 = sand.u32 %s186, 1
        %s1507 = scalar_lea.sflag [#allocation4], %s1506
        %s1508 = sand.u32 %s186, 1
        %s1509 = smul.addr %s1508, 8
        %s1510 = scalar_lea.vmem [#allocation3], %s1509
        // Predicated region
        $region49: #{tpu_custom_call.1} parent=47 // pred_check
          %p1511 = pneg %p196
        $region50: #{tpu_custom_call.1} parent=47 // pred_check_branch
          %1513 = sbr.rel (%p1511) target = $region52
        $region51: #{tpu_custom_call.1} parent=47 // pred_region
          %s1515 = ssub.s32 128, 128
          %1516 = vsyncadd %s1507, %s1515
          %s1517 = smul.addr %s21, 128
          %s1518 = scalar_lea.hbm %s7, %s1517
          %s1520 = sshll.u32 %s1510, 4
          %s1521 = int_to_ptr.vmem [resolvable:$true] %s1520
          %1523 = dma.vmem_to_hbm [thread:$0]  %s1521, 128, %s1518, %s1507
        $region52: #{tpu_custom_call.1} parent=47 // pred_fallthru
          _
      $region48: #{tpu_custom_call.1} parent=5 // pred_fallthru
        _
      %p1524 = scmp.le.s32.totalorder 2, %s16
      // Predicated region
      $region53: #{tpu_custom_call.1} parent=5 // pred_check
        %p1525 = pneg %p1524
      $region54: #{tpu_custom_call.1} parent=5 // pred_check_branch
        %1527 = sbr.rel (%p1525) target = $region56
      $region55: #{tpu_custom_call.1} parent=5 // pred_region
        %s1528 = ssub.s32 %s16, 2
        // Predicated region
        $region57: #{tpu_custom_call.1} parent=55 // pred_check
          %p1529 = pneg %p202
        $region58: #{tpu_custom_call.1} parent=55 // pred_check_branch
          %1531 = sbr.rel (%p1529) target = $region60
        $region59: #{tpu_custom_call.1} parent=55 // pred_region
          %s1532 = sand.u32 %s187, 1
          %s1533 = scalar_lea.sflag [#allocation4], %s1532
          %s1534 = sand.u32 %s187, 1
          %s1535 = smul.addr %s1534, 8
          %s1536 = scalar_lea.vmem [#allocation3], %s1535
          %1537 = dma.done %s1533, 128
        $region60: #{tpu_custom_call.1} parent=55 // pred_fallthru
          _
      $region56: #{tpu_custom_call.1} parent=5 // pred_fallthru
        _
    $region6: #{tpu_custom_call.1} parent=1 // loop_footer
      %s20 = sadd.s32 1, %s16
    $region7: #{tpu_custom_call.1} parent=1 // loop_footer_branch
      %15 = sbr.rel target = $region3
    $region8: #{tpu_custom_call.1} parent=1 // loop_exit
      _
    %1538 = vsyncpa [#allocation4], 1
    %s1539 = scalar_lea.sflag [#allocation4], 1
    %1540 = vsyncpa %s1539, 1

</llo_original>
